<compile_context>
chip_gen: v7x
topology: tpu7x:2x2x1
jax: 0.10.0
libtpu: 0.0.40
codegen_flags: <defaults>
</compile_context>

<pallas_src>
import math
import functools

import jax
import jax.numpy as jnp
from jax.experimental import pallas as pl
from jax.experimental.pallas import tpu as pltpu


# ----------------------------------------------------------------------------
# Kernel A: RMSNorm + QKV projection + rotate-half RoPE for one (batch, tile).
# ----------------------------------------------------------------------------
def qkv_rope_kernel(
    x_ref,              # (1, ts, D)  f32
    nw_ref,             # (1, D)      f32  attention_norm weight
    wq_ref, wk_ref, wv_ref,   # (D, D) bf16 (wq/wk columns de-interleaved per head)
    cos_ref, sin_ref,   # (ts, hd//2) f32
    q_ref, k_ref, v_ref,      # (1, H, ts, hd) bf16 outputs
    *, n_heads, head_dim, eps):
    hd = head_dim
    hd2 = hd // 2

    x = x_ref[0]                                       # (ts, D) f32
    ms = jnp.mean(x * x, axis=-1, keepdims=True)
    # reproduces the reference quirk: x * sqrt(mean(x^2)+eps) * w
    xn = (x * jnp.sqrt(ms + eps) * nw_ref[...]).astype(jnp.bfloat16)

    q = jnp.dot(xn, wq_ref[...], preferred_element_type=jnp.float32)
    k = jnp.dot(xn, wk_ref[...], preferred_element_type=jnp.float32)
    v = jnp.dot(xn, wv_ref[...], preferred_element_type=jnp.float32)

    cos = cos_ref[...]                                 # (ts, hd2)
    sin = sin_ref[...]
    scale = 1.0 / math.sqrt(hd)                        # folded into q

    for h in range(n_heads):                           # small static loop
        sl = slice(h * hd, (h + 1) * hd)
        qh = q[:, sl]
        kh = k[:, sl]
        qr, qi = qh[:, :hd2], qh[:, hd2:]              # de-interleaved layout
        kr, ki = kh[:, :hd2], kh[:, hd2:]
        q_ro = jnp.concatenate([qr * cos - qi * sin, qr * sin + qi * cos], axis=-1)
        k_ro = jnp.concatenate([kr * cos - ki * sin, kr * sin + ki * cos], axis=-1)
        q_ref[0, h, :, :] = (q_ro * scale).astype(q_ref.dtype)
        k_ref[0, h, :, :] = k_ro.astype(k_ref.dtype)
        v_ref[0, h, :, :] = v[:, sl].astype(v_ref.dtype)


# ----------------------------------------------------------------------------
# Kernel B: causal batched-head attention + wo + residual + FFN for one
# (batch, query-tile).
# ----------------------------------------------------------------------------
def attn_ffn_kernel(
    x_ref,              # (1, tq, D)    f32   (residual input)
    q_ref,              # (1, H, tq, hd) bf16
    k_ref, v_ref,       # (1, H, S, hd)  bf16
    bias_ref,           # (tq, S)        f32  additive causal bias (0 / -1e30)
    nw_ref,             # (1, D)         f32  ffn_norm weight
    wo_ref,             # (D, D)  bf16
    w1_ref, w2_ref, w3_ref,   # (D, Hd), (Hd, D), (D, Hd) bf16
    out_ref,            # (1, tq, D) f32
    *, n_heads, head_dim, eps):
    hd = head_dim

    x = x_ref[0]                                       # (tq, D)  f32
    q = q_ref[0]                                       # (H, tq, hd) bf16
    k = k_ref[0]                                       # (H, S, hd)  bf16
    v = v_ref[0]

    # ---- batched-head scores (1/sqrt(hd) already folded into q) ----
    scores = jnp.einsum('hqd,hkd->hqk', q, k,
                        preferred_element_type=jnp.float32)     # (H, tq, S)
    scores = scores + bias_ref[...][None, :, :]

    m = jnp.max(scores, axis=-1, keepdims=True)
    p = jnp.exp(scores - m)
    denom = jnp.sum(p, axis=-1, keepdims=True)                  # (H, tq, 1)
    ctx = jnp.einsum('hqk,hkd->hqd', p.astype(jnp.bfloat16), v,
                     preferred_element_type=jnp.float32)        # (H, tq, hd)
    ctx = ctx * pl.reciprocal(denom, approx=True)               # EUP, not VALU

    # ---- output projection: accumulate per head (no concat materialized) ----
    tq, D = x.shape
    attn = jnp.zeros((tq, D), jnp.float32)
    for h in range(n_heads):
        attn = attn + jnp.dot(ctx[h].astype(jnp.bfloat16),
                              wo_ref[h * hd:(h + 1) * hd, :],
                              preferred_element_type=jnp.float32)

    h_res = x + attn                                   # first residual

    # ---- FFN RMSNorm + SwiGLU ----
    ms = jnp.mean(h_res * h_res, axis=-1, keepdims=True)
    hn = (h_res * jnp.sqrt(ms + eps) * nw_ref[...]).astype(jnp.bfloat16)

    a = jnp.dot(hn, w1_ref[...], preferred_element_type=jnp.float32)
    g = jnp.dot(hn, w3_ref[...], preferred_element_type=jnp.float32)
    sig = 0.5 * (jnp.tanh(0.5 * a) + 1.0)              # sigmoid via tanh (EUP)
    gated = (a * sig * g).astype(jnp.bfloat16)
    ff = jnp.dot(gated, w2_ref[...], preferred_element_type=jnp.float32)

    out_ref[0] = (h_res + ff).astype(out_ref.dtype)    # second residual


# ----------------------------------------------------------------------------
# Wrapper: weight prep (bf16 + RoPE de-interleave), grids / BlockSpecs.
# ----------------------------------------------------------------------------
def transformer_block(x, params, freqs_cos, freqs_sin, *, n_heads, eps,
                      seq_tile=256):
    B, S, D = x.shape
    hd = D // n_heads
    hd2 = hd // 2
    Hd = params["w1_t"].shape[1]

    ts = min(seq_tile, S)
    assert S % ts == 0, "sequence length must be a multiple of the tile size"

    bf16 = jnp.bfloat16

    # De-interleave the columns of wq / wk within each head so the in-kernel
    # RoPE is a rotate-half (pure elementwise + lane slices). Scores are
    # invariant because q and k receive the same permutation; v / wo untouched.
    j = jnp.arange(hd2)
    per_head = jnp.concatenate([2 * j, 2 * j + 1])                 # (hd,)
    perm = (jnp.arange(n_heads)[:, None] * hd + per_head[None, :]).reshape(-1)

    wq_p = params["wq_t"][:, perm].astype(bf16)
    wk_p = params["wk_t"][:, perm].astype(bf16)
    wv_b = params["wv_t"].astype(bf16)
    wo_b = params["wo_t"].astype(bf16)
    w1_b = params["w1_t"].astype(bf16)
    w2_b = params["w2_t"].astype(bf16)
    w3_b = params["w3_t"].astype(bf16)

    # Precomputed additive causal bias (single vadd per tile inside the kernel).
    rows = jnp.arange(S)[:, None]
    cols = jnp.arange(S)[None, :]
    bias = jnp.where(cols <= rows, 0.0, -1e30).astype(jnp.float32)   # (S, S)

    const2 = lambda shape: pl.BlockSpec(shape, lambda b, i: (0, 0))
    par2 = pltpu.CompilerParams(dimension_semantics=("parallel", "parallel"))

    # ---- kernel A: norm + QKV + RoPE, head-major bf16 outputs ----
    kernel_a = functools.partial(qkv_rope_kernel,
                                 n_heads=n_heads, head_dim=hd, eps=eps)
    qkv_spec = pl.BlockSpec((1, n_heads, ts, hd), lambda b, i: (b, 0, i, 0))
    q, k, v = pl.pallas_call(
        kernel_a,
        out_shape=(jax.ShapeDtypeStruct((B, n_heads, S, hd), bf16),) * 3,
        grid=(B, S // ts),
        in_specs=[
            pl.BlockSpec((1, ts, D), lambda b, i: (b, i, 0)),     # x
            const2((1, D)),                                       # attn norm w
            const2((D, D)), const2((D, D)), const2((D, D)),       # wq wk wv
            pl.BlockSpec((ts, hd2), lambda b, i: (i, 0)),         # cos
            pl.BlockSpec((ts, hd2), lambda b, i: (i, 0)),         # sin
        ],
        out_specs=(qkv_spec, qkv_spec, qkv_spec),
        compiler_params=par2,
    )(x, params["attn_norm_w"], wq_p, wk_p, wv_b, freqs_cos, freqs_sin)

    # ---- kernel B: attention + wo + residual + FFN + residual ----
    # TODO(synk): for very long S / large D add flash-style online-softmax KV
    # tiling (K/V are currently full-sequence resident per q-tile) and
    # single-buffered weight specs to fit v7x's 64 MiB VMEM.
    kernel_b = functools.partial(attn_ffn_kernel,
                                 n_heads=n_heads, head_dim=hd, eps=eps)
    out = pl.pallas_call(
        kernel_b,
        out_shape=jax.ShapeDtypeStruct((B, S, D), x.dtype),
        grid=(B, S // ts),
        in_specs=[
            pl.BlockSpec((1, ts, D), lambda b, i: (b, i, 0)),               # x tile
            pl.BlockSpec((1, n_heads, ts, hd), lambda b, i: (b, 0, i, 0)),  # q tile
            pl.BlockSpec((1, n_heads, S, hd), lambda b, i: (b, 0, 0, 0)),   # k full
            pl.BlockSpec((1, n_heads, S, hd), lambda b, i: (b, 0, 0, 0)),   # v full
            pl.BlockSpec((ts, S), lambda b, i: (i, 0)),                     # causal bias
            const2((1, D)),                                                 # ffn norm w
            const2((D, D)),                                                 # wo
            const2((D, Hd)), const2((Hd, D)), const2((D, Hd)),              # w1 w2 w3
        ],
        out_specs=pl.BlockSpec((1, ts, D), lambda b, i: (b, i, 0)),
        compiler_params=par2,
    )(x, q, k, v, bias, params["ffn_norm_w"], wo_b, w1_b, w2_b, w3_b)

    return out


# ----------------------------------------------------------------------------
# Parameter / RoPE construction (plain JAX glue, deterministic).
# ----------------------------------------------------------------------------
def init_params(key, dim, hidden_dim, scale=0.02):
    ks = jax.random.split(key, 7)

    def w(k, shape):
        return scale * jax.random.normal(k, shape, jnp.float32)

    return {
        "attn_norm_w": jnp.ones((1, dim), jnp.float32),   # torch.ones(dim)
        "ffn_norm_w": jnp.ones((1, dim), jnp.float32),
        # stored as [in, out] (== W.T of PyTorch's [out, in])
        "wq_t": w(ks[0], (dim, dim)),
        "wk_t": w(ks[1], (dim, dim)),
        "wv_t": w(ks[2], (dim, dim)),
        "wo_t": w(ks[3], (dim, dim)),
        "w1_t": w(ks[4], (dim, hidden_dim)),
        "w2_t": w(ks[5], (hidden_dim, dim)),
        "w3_t": w(ks[6], (dim, hidden_dim)),
    }


def build_freqs(seq_len, head_dim, theta=10000.0):
    inv = 1.0 / (theta ** (jnp.arange(0, head_dim, 2, dtype=jnp.float32) / head_dim))
    t = jnp.arange(seq_len, dtype=jnp.float32)
    freqs = jnp.outer(t, inv)                    # (S, head_dim//2)
    return jnp.cos(freqs), jnp.sin(freqs)


# ----------------------------------------------------------------------------
# Pure-JAX reference (same semantics, f32, interleaved RoPE) for checking.
# ----------------------------------------------------------------------------
def ref_transformer_block(x, params, cos, sin, n_heads, eps):
    B, S, D = x.shape
    hd = D // n_heads
    hi = jax.lax.Precision.HIGHEST
    dot = functools.partial(jnp.matmul, precision=hi)

    def rmsnorm(v, w):
        ms = jnp.mean(v * v, axis=-1, keepdims=True)
        return v * jnp.sqrt(ms + eps) * w      # reproduces the sqrt (not rsqrt)

    xn = rmsnorm(x, params["attn_norm_w"][0])
    q = dot(xn, params["wq_t"]).reshape(B, S, n_heads, hd)
    k = dot(xn, params["wk_t"]).reshape(B, S, n_heads, hd)
    v = dot(xn, params["wv_t"]).reshape(B, S, n_heads, hd)

    def rope(t):
        tr = t.reshape(B, S, n_heads, hd // 2, 2)
        t_r, t_i = tr[..., 0], tr[..., 1]
        c = cos[None, :, None, :]
        s_ = sin[None, :, None, :]
        o_r = t_r * c - t_i * s_
        o_i = t_r * s_ + t_i * c
        return jnp.stack([o_r, o_i], axis=-1).reshape(B, S, n_heads, hd)

    q, k = rope(q), rope(k)
    q, k, v = (a.transpose(0, 2, 1, 3) for a in (q, k, v))   # (B, H, S, hd)
    scores = jnp.einsum("bhqd,bhkd->bhqk", q, k, precision=hi) / math.sqrt(hd)
    mask = jnp.tril(jnp.ones((S, S), bool))
    scores = jnp.where(mask, scores, -jnp.inf)
    p = jax.nn.softmax(scores, axis=-1)
    o = jnp.einsum("bhqk,bhkd->bhqd", p, v, precision=hi)
    o = o.transpose(0, 2, 1, 3).reshape(B, S, D)
    h = x + dot(o, params["wo_t"])

    hn = rmsnorm(h, params["ffn_norm_w"][0])
    a = dot(hn, params["w1_t"])
    b = dot(hn, params["w3_t"])
    ff = dot(jax.nn.silu(a) * b, params["w2_t"])
    return h + ff


# ----------------------------------------------------------------------------
if __name__ == "__main__":
    # Small, TPU-friendly shapes implied by the module.
    B, S = 2, 8
    dim, n_heads = 256, 2
    multiple_of = 256
    eps = 1e-5
    head_dim = dim // n_heads

    # hidden_dim = None path of FeedForward.__init__
    hidden = 4 * dim
    hidden = int(2 * hidden / 3)
    hidden = multiple_of * ((hidden + multiple_of - 1) // multiple_of)  # 768

    key = jax.random.PRNGKey(0)
    kx, kp = jax.random.split(key)
    x = jax.random.normal(kx, (B, S, dim), jnp.float32)
    params = init_params(kp, dim, hidden)
    freqs_cos, freqs_sin = build_freqs(S, head_dim)

    out = transformer_block(x, params, freqs_cos, freqs_sin,
                            n_heads=n_heads, eps=eps)
    out = jax.block_until_ready(out)

    ref = ref_transformer_block(x, params, freqs_cos, freqs_sin, n_heads, eps)
    err = float(jnp.max(jnp.abs(out - ref)))
    assert out.shape == (B, S, dim), out.shape
    assert err < 5e-2, f"max abs err {err}"
    print("KERNEL_OK")
</pallas_src>

<mosaic_0001>
module attributes {stable_mosaic.version = 11 : i64} {
  func.func @qkv_rope_kernel(%arg0: i32, %arg1: i32, %arg2: memref<1x8x256xf32, #tpu.memory_space<vmem>>, %arg3: memref<1x256xf32, #tpu.memory_space<vmem>>, %arg4: memref<256x256xbf16, #tpu.memory_space<vmem>>, %arg5: memref<256x256xbf16, #tpu.memory_space<vmem>>, %arg6: memref<256x256xbf16, #tpu.memory_space<vmem>>, %arg7: memref<8x64xf32, #tpu.memory_space<vmem>>, %arg8: memref<8x64xf32, #tpu.memory_space<vmem>>, %arg9: memref<1x2x8x128xbf16, #tpu.memory_space<vmem>>, %arg10: memref<1x2x8x128xbf16, #tpu.memory_space<vmem>>, %arg11: memref<1x2x8x128xbf16, #tpu.memory_space<vmem>>) attributes {dimension_semantics = [#tpu.dimension_semantics<parallel>, #tpu.dimension_semantics<parallel>], iteration_bounds = array<i64: 2, 1>, scalar_prefetch = 0 : i64, scratch_operands = 0 : i64, tpu.core_type = #tpu.core_type<tc>, window_params = [{transform_indices = @transform_0, window_bounds = array<i64: 1, 8, 256>}, {pipeline_mode = #tpu.pipeline_mode<synchronous>, transform_indices = @transform_1, window_bounds = array<i64: 1, 256>}, {pipeline_mode = #tpu.pipeline_mode<synchronous>, transform_indices = @transform_2, window_bounds = array<i64: 256, 256>}, {pipeline_mode = #tpu.pipeline_mode<synchronous>, transform_indices = @transform_3, window_bounds = array<i64: 256, 256>}, {pipeline_mode = #tpu.pipeline_mode<synchronous>, transform_indices = @transform_4, window_bounds = array<i64: 256, 256>}, {transform_indices = @transform_5, window_bounds = array<i64: 8, 64>}, {transform_indices = @transform_6, window_bounds = array<i64: 8, 64>}, {transform_indices = @transform_7, window_bounds = array<i64: 1, 2, 8, 128>}, {transform_indices = @transform_8, window_bounds = array<i64: 1, 2, 8, 128>}, {transform_indices = @transform_9, window_bounds = array<i64: 1, 2, 8, 128>}]} {
    %c0 = arith.constant 0 : index
    %c0_0 = arith.constant 0 : index
    %c0_1 = arith.constant 0 : index
    %0 = vector.load %arg2[%c0, %c0_0, %c0_1] : memref<1x8x256xf32, #tpu.memory_space<vmem>>, vector<1x8x256xf32>
    %1 = vector.shape_cast %0 : vector<1x8x256xf32> to vector<8x256xf32>
    %2 = arith.mulf %1, %1 : vector<8x256xf32>
    %cst = arith.constant dense<0.000000e+00> : vector<8xf32>
    %3 = vector.multi_reduction <add>, %2, %cst [1] : vector<8x256xf32> to vector<8xf32>
    %4 = vector.shape_cast %3 : vector<8xf32> to vector<8x1xf32>
    %cst_2 = arith.constant 2.560000e+02 : f32
    %5 = vector.broadcast %cst_2 : f32 to vector<8x1xf32>
    %6 = arith.divf %4, %5 : vector<8x1xf32>
    %cst_3 = arith.constant 9.99999974E-6 : f32
    %7 = vector.broadcast %cst_3 : f32 to vector<8x1xf32>
    %8 = arith.addf %6, %7 : vector<8x1xf32>
    %9 = math.sqrt %8 : vector<8x1xf32>
    %10 = vector.broadcast %9 : vector<8x1xf32> to vector<8x256xf32>
    %11 = arith.mulf %1, %10 : vector<8x256xf32>
    %c0_4 = arith.constant 0 : index
    %c0_5 = arith.constant 0 : index
    %12 = vector.load %arg3[%c0_4, %c0_5] : memref<1x256xf32, #tpu.memory_space<vmem>>, vector<1x256xf32>
    %13 = vector.broadcast %12 : vector<1x256xf32> to vector<8x256xf32>
    %14 = arith.mulf %11, %13 : vector<8x256xf32>
    %15 = arith.truncf %14 : vector<8x256xf32> to vector<8x256xbf16>
    %c0_6 = arith.constant 0 : index
    %c0_7 = arith.constant 0 : index
    %16 = vector.load %arg4[%c0_6, %c0_7] : memref<256x256xbf16, #tpu.memory_space<vmem>>, vector<256x256xbf16>
    %cst_8 = arith.constant dense<0.000000e+00> : vector<8x256xf32>
    %17 = tpu.matmul %15, %16, %cst_8 {dimension_numbers = #tpu.dot_dimension_numbers<[1], [0], [0], [1], [0, 0, 1, 1], [], []>} : vector<8x256xbf16>, vector<256x256xbf16>, vector<8x256xf32> -> vector<8x256xf32>
    %c0_9 = arith.constant 0 : index
    %c0_10 = arith.constant 0 : index
    %18 = vector.load %arg5[%c0_9, %c0_10] : memref<256x256xbf16, #tpu.memory_space<vmem>>, vector<256x256xbf16>
    %cst_11 = arith.constant dense<0.000000e+00> : vector<8x256xf32>
    %19 = tpu.matmul %15, %18, %cst_11 {dimension_numbers = #tpu.dot_dimension_numbers<[1], [0], [0], [1], [0, 0, 1, 1], [], []>} : vector<8x256xbf16>, vector<256x256xbf16>, vector<8x256xf32> -> vector<8x256xf32>
    %c0_12 = arith.constant 0 : index
    %c0_13 = arith.constant 0 : index
    %20 = vector.load %arg6[%c0_12, %c0_13] : memref<256x256xbf16, #tpu.memory_space<vmem>>, vector<256x256xbf16>
    %cst_14 = arith.constant dense<0.000000e+00> : vector<8x256xf32>
    %21 = tpu.matmul %15, %20, %cst_14 {dimension_numbers = #tpu.dot_dimension_numbers<[1], [0], [0], [1], [0, 0, 1, 1], [], []>} : vector<8x256xbf16>, vector<256x256xbf16>, vector<8x256xf32> -> vector<8x256xf32>
    %c0_15 = arith.constant 0 : index
    %c0_16 = arith.constant 0 : index
    %22 = vector.load %arg7[%c0_15, %c0_16] : memref<8x64xf32, #tpu.memory_space<vmem>>, vector<8x64xf32>
    %c0_17 = arith.constant 0 : index
    %c0_18 = arith.constant 0 : index
    %23 = vector.load %arg8[%c0_17, %c0_18] : memref<8x64xf32, #tpu.memory_space<vmem>>, vector<8x64xf32>
    %24 = vector.extract_strided_slice %17 {offsets = [0, 0], sizes = [8, 128], strides = [1, 1]} : vector<8x256xf32> to vector<8x128xf32>
    %25 = vector.extract_strided_slice %19 {offsets = [0, 0], sizes = [8, 128], strides = [1, 1]} : vector<8x256xf32> to vector<8x128xf32>
    %26 = vector.extract_strided_slice %24 {offsets = [0, 0], sizes = [8, 64], strides = [1, 1]} : vector<8x128xf32> to vector<8x64xf32>
    %27 = vector.extract_strided_slice %24 {offsets = [0, 64], sizes = [8, 64], strides = [1, 1]} : vector<8x128xf32> to vector<8x64xf32>
    %28 = vector.extract_strided_slice %25 {offsets = [0, 0], sizes = [8, 64], strides = [1, 1]} : vector<8x128xf32> to vector<8x64xf32>
    %29 = vector.extract_strided_slice %25 {offsets = [0, 64], sizes = [8, 64], strides = [1, 1]} : vector<8x128xf32> to vector<8x64xf32>
    %30 = arith.mulf %26, %22 : vector<8x64xf32>
    %31 = arith.mulf %27, %23 : vector<8x64xf32>
    %32 = arith.subf %30, %31 : vector<8x64xf32>
    %33 = arith.mulf %26, %23 : vector<8x64xf32>
    %34 = arith.mulf %27, %22 : vector<8x64xf32>
    %35 = arith.addf %33, %34 : vector<8x64xf32>
    %36 = tpu.concatenate %32, %35 in 1 : vector<8x64xf32>, vector<8x64xf32> -> vector<8x128xf32>
    %37 = arith.mulf %28, %22 : vector<8x64xf32>
    %38 = arith.mulf %29, %23 : vector<8x64xf32>
    %39 = arith.subf %37, %38 : vector<8x64xf32>
    %40 = arith.mulf %28, %23 : vector<8x64xf32>
    %41 = arith.mulf %29, %22 : vector<8x64xf32>
    %42 = arith.addf %40, %41 : vector<8x64xf32>
    %43 = tpu.concatenate %39, %42 in 1 : vector<8x64xf32>, vector<8x64xf32> -> vector<8x128xf32>
    %cst_19 = arith.constant 0.0883883461 : f32
    %44 = vector.broadcast %cst_19 : f32 to vector<8x128xf32>
    %45 = arith.mulf %36, %44 : vector<8x128xf32>
    %46 = arith.truncf %45 : vector<8x128xf32> to vector<8x128xbf16>
    %c0_20 = arith.constant 0 : index
    %c0_21 = arith.constant 0 : index
    %c0_22 = arith.constant 0 : index
    %c0_23 = arith.constant 0 : index
    %47 = vector.load %arg9[%c0_20, %c0_21, %c0_22, %c0_23] : memref<1x2x8x128xbf16, #tpu.memory_space<vmem>>, vector<1x1x8x128xbf16>
    %48 = vector.shape_cast %47 : vector<1x1x8x128xbf16> to vector<8x128xbf16>
    %49 = vector.shape_cast %46 : vector<8x128xbf16> to vector<1x1x8x128xbf16>
    tpu.vector_store %arg9[%c0_20, %c0_21, %c0_22, %c0_23], %49 {strides = array<i32>} : memref<1x2x8x128xbf16, #tpu.memory_space<vmem>>, vector<1x1x8x128xbf16>,
    %50 = arith.truncf %43 : vector<8x128xf32> to vector<8x128xbf16>
    %c0_24 = arith.constant 0 : index
    %c0_25 = arith.constant 0 : index
    %c0_26 = arith.constant 0 : index
    %c0_27 = arith.constant 0 : index
    %51 = vector.load %arg10[%c0_24, %c0_25, %c0_26, %c0_27] : memref<1x2x8x128xbf16, #tpu.memory_space<vmem>>, vector<1x1x8x128xbf16>
    %52 = vector.shape_cast %51 : vector<1x1x8x128xbf16> to vector<8x128xbf16>
    %53 = vector.shape_cast %50 : vector<8x128xbf16> to vector<1x1x8x128xbf16>
    tpu.vector_store %arg10[%c0_24, %c0_25, %c0_26, %c0_27], %53 {strides = array<i32>} : memref<1x2x8x128xbf16, #tpu.memory_space<vmem>>, vector<1x1x8x128xbf16>,
    %54 = vector.extract_strided_slice %21 {offsets = [0, 0], sizes = [8, 128], strides = [1, 1]} : vector<8x256xf32> to vector<8x128xf32>
    %55 = arith.truncf %54 : vector<8x128xf32> to vector<8x128xbf16>
    %c0_28 = arith.constant 0 : index
    %c0_29 = arith.constant 0 : index
    %c0_30 = arith.constant 0 : index
    %c0_31 = arith.constant 0 : index
    %56 = vector.load %arg11[%c0_28, %c0_29, %c0_30, %c0_31] : memref<1x2x8x128xbf16, #tpu.memory_space<vmem>>, vector<1x1x8x128xbf16>
    %57 = vector.shape_cast %56 : vector<1x1x8x128xbf16> to vector<8x128xbf16>
    %58 = vector.shape_cast %55 : vector<8x128xbf16> to vector<1x1x8x128xbf16>
    tpu.vector_store %arg11[%c0_28, %c0_29, %c0_30, %c0_31], %58 {strides = array<i32>} : memref<1x2x8x128xbf16, #tpu.memory_space<vmem>>, vector<1x1x8x128xbf16>,
    %59 = vector.extract_strided_slice %17 {offsets = [0, 128], sizes = [8, 128], strides = [1, 1]} : vector<8x256xf32> to vector<8x128xf32>
    %60 = vector.extract_strided_slice %19 {offsets = [0, 128], sizes = [8, 128], strides = [1, 1]} : vector<8x256xf32> to vector<8x128xf32>
    %61 = vector.extract_strided_slice %59 {offsets = [0, 0], sizes = [8, 64], strides = [1, 1]} : vector<8x128xf32> to vector<8x64xf32>
    %62 = vector.extract_strided_slice %59 {offsets = [0, 64], sizes = [8, 64], strides = [1, 1]} : vector<8x128xf32> to vector<8x64xf32>
    %63 = vector.extract_strided_slice %60 {offsets = [0, 0], sizes = [8, 64], strides = [1, 1]} : vector<8x128xf32> to vector<8x64xf32>
    %64 = vector.extract_strided_slice %60 {offsets = [0, 64], sizes = [8, 64], strides = [1, 1]} : vector<8x128xf32> to vector<8x64xf32>
    %65 = arith.mulf %61, %22 : vector<8x64xf32>
    %66 = arith.mulf %62, %23 : vector<8x64xf32>
    %67 = arith.subf %65, %66 : vector<8x64xf32>
    %68 = arith.mulf %61, %23 : vector<8x64xf32>
    %69 = arith.mulf %62, %22 : vector<8x64xf32>
    %70 = arith.addf %68, %69 : vector<8x64xf32>
    %71 = tpu.concatenate %67, %70 in 1 : vector<8x64xf32>, vector<8x64xf32> -> vector<8x128xf32>
    %72 = arith.mulf %63, %22 : vector<8x64xf32>
    %73 = arith.mulf %64, %23 : vector<8x64xf32>
    %74 = arith.subf %72, %73 : vector<8x64xf32>
    %75 = arith.mulf %63, %23 : vector<8x64xf32>
    %76 = arith.mulf %64, %22 : vector<8x64xf32>
    %77 = arith.addf %75, %76 : vector<8x64xf32>
    %78 = tpu.concatenate %74, %77 in 1 : vector<8x64xf32>, vector<8x64xf32> -> vector<8x128xf32>
    %cst_32 = arith.constant 0.0883883461 : f32
    %79 = vector.broadcast %cst_32 : f32 to vector<8x128xf32>
    %80 = arith.mulf %71, %79 : vector<8x128xf32>
    %81 = arith.truncf %80 : vector<8x128xf32> to vector<8x128xbf16>
    %c0_33 = arith.constant 0 : index
    %c1 = arith.constant 1 : index
    %c0_34 = arith.constant 0 : index
    %c0_35 = arith.constant 0 : index
    %82 = vector.load %arg9[%c0_33, %c1, %c0_34, %c0_35] : memref<1x2x8x128xbf16, #tpu.memory_space<vmem>>, vector<1x1x8x128xbf16>
    %83 = vector.shape_cast %82 : vector<1x1x8x128xbf16> to vector<8x128xbf16>
    %84 = vector.shape_cast %81 : vector<8x128xbf16> to vector<1x1x8x128xbf16>
    tpu.vector_store %arg9[%c0_33, %c1, %c0_34, %c0_35], %84 {strides = array<i32>} : memref<1x2x8x128xbf16, #tpu.memory_space<vmem>>, vector<1x1x8x128xbf16>,
    %85 = arith.truncf %78 : vector<8x128xf32> to vector<8x128xbf16>
    %c0_36 = arith.constant 0 : index
    %c1_37 = arith.constant 1 : index
    %c0_38 = arith.constant 0 : index
    %c0_39 = arith.constant 0 : index
    %86 = vector.load %arg10[%c0_36, %c1_37, %c0_38, %c0_39] : memref<1x2x8x128xbf16, #tpu.memory_space<vmem>>, vector<1x1x8x128xbf16>
    %87 = vector.shape_cast %86 : vector<1x1x8x128xbf16> to vector<8x128xbf16>
    %88 = vector.shape_cast %85 : vector<8x128xbf16> to vector<1x1x8x128xbf16>
    tpu.vector_store %arg10[%c0_36, %c1_37, %c0_38, %c0_39], %88 {strides = array<i32>} : memref<1x2x8x128xbf16, #tpu.memory_space<vmem>>, vector<1x1x8x128xbf16>,
    %89 = vector.extract_strided_slice %21 {offsets = [0, 128], sizes = [8, 128], strides = [1, 1]} : vector<8x256xf32> to vector<8x128xf32>
    %90 = arith.truncf %89 : vector<8x128xf32> to vector<8x128xbf16>
    %c0_40 = arith.constant 0 : index
    %c1_41 = arith.constant 1 : index
    %c0_42 = arith.constant 0 : index
    %c0_43 = arith.constant 0 : index
    %91 = vector.load %arg11[%c0_40, %c1_41, %c0_42, %c0_43] : memref<1x2x8x128xbf16, #tpu.memory_space<vmem>>, vector<1x1x8x128xbf16>
    %92 = vector.shape_cast %91 : vector<1x1x8x128xbf16> to vector<8x128xbf16>
    %93 = vector.shape_cast %90 : vector<8x128xbf16> to vector<1x1x8x128xbf16>
    tpu.vector_store %arg11[%c0_40, %c1_41, %c0_42, %c0_43], %93 {strides = array<i32>} : memref<1x2x8x128xbf16, #tpu.memory_space<vmem>>, vector<1x1x8x128xbf16>,
    return
  }
  func.func @transform_0(%arg0: i32, %arg1: i32) -> (i32, i32, i32) {
    %c0_i32 = arith.constant 0 : i32
    %c0_i32_0 = arith.constant 0 : i32
    return %arg0, %arg1, %c0_i32 : i32, i32, i32
  }
  func.func @transform_1(%arg0: i32, %arg1: i32) -> (i32, i32) {
    %c0_i32 = arith.constant 0 : i32
    %c0_i32_0 = arith.constant 0 : i32
    %c0_i32_1 = arith.constant 0 : i32
    return %c0_i32, %c0_i32_0 : i32, i32
  }
  func.func @transform_2(%arg0: i32, %arg1: i32) -> (i32, i32) {
    %c0_i32 = arith.constant 0 : i32
    %c0_i32_0 = arith.constant 0 : i32
    %c0_i32_1 = arith.constant 0 : i32
    return %c0_i32, %c0_i32_0 : i32, i32
  }
  func.func @transform_3(%arg0: i32, %arg1: i32) -> (i32, i32) {
    %c0_i32 = arith.constant 0 : i32
    %c0_i32_0 = arith.constant 0 : i32
    %c0_i32_1 = arith.constant 0 : i32
    return %c0_i32, %c0_i32_0 : i32, i32
  }
  func.func @transform_4(%arg0: i32, %arg1: i32) -> (i32, i32) {
    %c0_i32 = arith.constant 0 : i32
    %c0_i32_0 = arith.constant 0 : i32
    %c0_i32_1 = arith.constant 0 : i32
    return %c0_i32, %c0_i32_0 : i32, i32
  }
  func.func @transform_5(%arg0: i32, %arg1: i32) -> (i32, i32) {
    %c0_i32 = arith.constant 0 : i32
    %c0_i32_0 = arith.constant 0 : i32
    return %arg1, %c0_i32 : i32, i32
  }
  func.func @transform_6(%arg0: i32, %arg1: i32) -> (i32, i32) {
    %c0_i32 = arith.constant 0 : i32
    %c0_i32_0 = arith.constant 0 : i32
    return %arg1, %c0_i32 : i32, i32
  }
  func.func @transform_7(%arg0: i32, %arg1: i32) -> (i32, i32, i32, i32) {
    %c0_i32 = arith.constant 0 : i32
    %c0_i32_0 = arith.constant 0 : i32
    %c0_i32_1 = arith.constant 0 : i32
    return %arg0, %c0_i32, %arg1, %c0_i32_0 : i32, i32, i32, i32
  }
  func.func @transform_8(%arg0: i32, %arg1: i32) -> (i32, i32, i32, i32) {
    %c0_i32 = arith.constant 0 : i32
    %c0_i32_0 = arith.constant 0 : i32
    %c0_i32_1 = arith.constant 0 : i32
    return %arg0, %c0_i32, %arg1, %c0_i32_0 : i32, i32, i32, i32
  }
  func.func @transform_9(%arg0: i32, %arg1: i32) -> (i32, i32, i32, i32) {
    %c0_i32 = arith.constant 0 : i32
    %c0_i32_0 = arith.constant 0 : i32
    %c0_i32_1 = arith.constant 0 : i32
    return %arg0, %c0_i32, %arg1, %c0_i32_0 : i32, i32, i32, i32
  }
}

</mosaic_0001>

<llo_original>
// kernel: tpu_custom_call.1
$region0: #{tpu_custom_call.1}
  #allocation0 [shape = 'u32[]', space=smem, size = 0x4, offset = 0x4, fixed_abs, tag = 'smem constant byte address 0x4 - core index']
  #allocation1 [shape = 'u32[144,128]{1,0:T(1,128)}', space=vmem, size = 0x12000, scoped, tag = 'internal scratch']
  %s0 = inlined_call_operand.hbm [shape: f32[2,8,256], index: 0, kind: input, shape index: {}]
  %s1 = inlined_call_operand.vmem [shape: f32[1,256], index: 1, kind: input, shape index: {}]
  %s2 = inlined_call_operand.hbm [shape: bf16[256,256], index: 2, kind: input, shape index: {}]
  %s3 = inlined_call_operand.hbm [shape: bf16[256,256], index: 3, kind: input, shape index: {}]
  %s4 = inlined_call_operand.hbm [shape: bf16[256,256], index: 4, kind: input, shape index: {}]
  %s5 = inlined_call_operand.vmem [shape: f32[8,64], index: 5, kind: input, shape index: {}]
  %s6 = inlined_call_operand.vmem [shape: f32[8,64], index: 6, kind: input, shape index: {}]
  %s7 = inlined_call_operand.hbm [shape: bf16[2,2,8,128], index: 7, kind: output, shape index: {0}]
  %s8 = inlined_call_operand.hbm [shape: bf16[2,2,8,128], index: 8, kind: output, shape index: {1}]
  %s9 = inlined_call_operand.hbm [shape: bf16[2,2,8,128], index: 9, kind: output, shape index: {2}]
  %10 = xla_tuple %s7, %s8, %s9
  %s11 = sld [smem:[#allocation0]]
  $region93: #{tpu_custom_call.1} parent=0
    _
  %s13 = ssub.s32 1, %s11
  %s14 = scalar_select 0, %s13, %s11
  $region1: #{tpu_custom_call.1} parent=0
    #allocation2 [shape = 'u8[16384]{0}', space=vmem, size = 0x4000, scoped, tag = 'input window, operand 0']
    #allocation3 [shape = 's32[2]{0}', space=sflag, size = 0x8, scoped, tag = 'scoped memory for tpu_custom_call.1']
    #allocation4 [shape = 's32[2]{0}', space=sflag, size = 0x8, scoped, tag = 'scoped memory for tpu_custom_call.1']
    #allocation5 [shape = 'u8[131072]{0}', space=vmem, size = 0x20000, scoped, tag = 'input window, operand 2, single buffered']
    #allocation6 [shape = 's32[1]{0}', space=sflag, size = 0x4, scoped, tag = 'scoped memory for tpu_custom_call.1']
    #allocation7 [shape = 'u8[131072]{0}', space=vmem, size = 0x20000, scoped, tag = 'input window, operand 3, single buffered']
    #allocation8 [shape = 'u8[131072]{0}', space=vmem, size = 0x20000, scoped, tag = 'input window, operand 4, single buffered']
    #allocation9 [shape = 's32[1]{0}', space=sflag, size = 0x4, scoped, tag = 'scoped memory for tpu_custom_call.1']
    #allocation10 [shape = 'u8[8192]{0}', space=vmem, size = 0x2000, scoped, tag = 'output window, operand 0']
    #allocation11 [shape = 'u8[8192]{0}', space=vmem, size = 0x2000, scoped, tag = 'output window, operand 1']
    #allocation12 [shape = 's32[2]{0}', space=sflag, size = 0x8, scoped, tag = 'scoped memory for tpu_custom_call.1']
    #allocation13 [shape = 'u8[8192]{0}', space=vmem, size = 0x2000, scoped, tag = 'output window, operand 2']
    %15 = vsyncpa [#allocation3], 0
    %s16 = scalar_lea.sflag [#allocation3], 1
    %17 = vsyncpa %s16, 0
    %18 = vsyncpa [#allocation6], 0
    %19 = vsyncpa [#allocation9], 0
    %20 = vsyncpa [#allocation4], 0
    %s21 = scalar_lea.sflag [#allocation4], 1
    %22 = vsyncpa %s21, 0
    %23 = vsyncpa [#allocation12], 0
    %s24 = scalar_lea.sflag [#allocation12], 1
    %25 = vsyncpa %s24, 0
    loop: start=0, step=1, limit=4
    $region2: #{tpu_custom_call.1} parent=1 // loop_pre_header
      _
    $region3: #{tpu_custom_call.1} parent=1 // loop_header
      %s27 = sphi 0, %s31
      %p28 = scmp.ge.s32.totalorder %s27, 4
      %s34 = sphi 0, %s46
      %s35 = sphi 0, %s42
      %s36 = sphi 0, %s34
      %s37 = sphi 0, %s35
      %s38 = sphi 0, %s36
      %s39 = sphi 0, %s37
      %s51 = sphi 0, %s53
      %s54 = sphi 0, %s51
      %s55 = sphi 0, %s54
      %s71 = sphi 0, %s55
      %s75 = sphi 0, %s75
      %s77 = sphi 0, %s75
      %s78 = sphi 0, %s77
      %s92 = sphi 0, %s78
      %s96 = sphi 0, %s96
      %s98 = sphi 0, %s96
      %s99 = sphi 0, %s98
      %s113 = sphi 0, %s99
      %s117 = sphi 0, %s117
      %s119 = sphi 0, %s117
      %s120 = sphi 0, %s119
      %s134 = sphi 0, %s120
      %s138 = sphi 0, %s138
      %s140 = sphi 0, %s138
      %s141 = sphi 0, %s140
      %s155 = sphi 0, %s141
      %s161 = sphi 0, %s163
      %s164 = sphi 0, %s161
      %s165 = sphi 0, %s164
      %s181 = sphi 0, %s165
      %s187 = sphi 0, %s189
      %s190 = sphi 0, %s187
      %s191 = sphi 0, %s190
      %s207 = sphi 0, %s191
      %s215 = sphi 0, %s217
      %s218 = sphi 0, %s215
      %s219 = sphi 0, %s218
      %s235 = sphi 0, %s219
      %s243 = sphi 0, %s245
      %s246 = sphi 0, %s243
      %s247 = sphi 0, %s246
      %s263 = sphi 0, %s247
      %s271 = sphi 0, %s273
      %s274 = sphi 0, %s271
      %s275 = sphi 0, %s274
      %s291 = sphi 0, %s275
    $region4: #{tpu_custom_call.1} parent=1 // loop_header_branch
      %30 = sbr.rel (%p28) target = $region8
    $region5: #{tpu_custom_call.1} parent=1 // loop_body
      %s32 = ssub.s32 %s27, 1
      %s33 = ssub.s32 %s27, 2
      %s40 = sadd.s32 1, %s35
      %p41 = scmp.ge.s32.totalorder %s40, 1
      %s42 = scalar_select %p41, 0, %s40
      %s43 = sadd.s32 1, %s34
      %s44 = scalar_select %p41, %s43, %s34
      %p45 = scmp.ge.s32.totalorder %s44, 2
      %s46 = scalar_select %p45, 0, %s44
      %s47 = ssub.s32 %s34, %s46
      %s48 = ssub.s32 %s35, %s42
      %s49 = sor.u32 %s47, %s48
      %p50 = scmp.eq.s32.totalorder %s49, 0
      %s52 = sadd.s32 %s51, 1
      %s53 = scalar_select %p50, %s51, %s52
      %p56 = pneg %p50
      %p57 = scmp.eq.s32.totalorder %s27, 1
      %p58 = por %p56, %p57
      %p59 = scmp.ne.s32.totalorder %s51, %s54
      %p60 = scmp.eq.s32.totalorder %s27, 0
      %p61 = por %p59, %p60
      %p62 = scmp.ne.s32.totalorder %s51, %s54
      %p63 = scmp.eq.s32.totalorder %s32, 1
      %p64 = por %p62, %p63
      %p65 = scmp.ne.s32.totalorder %s54, %s55
      %p66 = scmp.eq.s32.totalorder %s32, 0
      %p67 = por %p65, %p66
      %p68 = scmp.ne.s32.totalorder %s54, %s55
      %p69 = scmp.eq.s32.totalorder %s33, 1
      %p70 = por %p68, %p69
      %p72 = scmp.ne.s32.totalorder %s55, %s71
      %p73 = scmp.eq.s32.totalorder %s33, 0
      %p74 = por %p72, %p73
      %s76 = sadd.s32 %s75, 1
      %p79 = scmp.eq.s32.totalorder %s27, 1
      %p80 = scmp.ne.s32.totalorder %s75, %s77
      %p81 = scmp.eq.s32.totalorder %s27, 0
      %p82 = por %p80, %p81
      %p83 = scmp.ne.s32.totalorder %s75, %s77
      %p84 = scmp.eq.s32.totalorder %s32, 1
      %p85 = por %p83, %p84
      %p86 = scmp.ne.s32.totalorder %s77, %s78
      %p87 = scmp.eq.s32.totalorder %s32, 0
      %p88 = por %p86, %p87
      %p89 = scmp.ne.s32.totalorder %s77, %s78
      %p90 = scmp.eq.s32.totalorder %s33, 1
      %p91 = por %p89, %p90
      %p93 = scmp.ne.s32.totalorder %s78, %s92
      %p94 = scmp.eq.s32.totalorder %s33, 0
      %p95 = por %p93, %p94
      %s97 = sadd.s32 %s96, 1
      %p100 = scmp.eq.s32.totalorder %s27, 1
      %p101 = scmp.ne.s32.totalorder %s96, %s98
      %p102 = scmp.eq.s32.totalorder %s27, 0
      %p103 = por %p101, %p102
      %p104 = scmp.ne.s32.totalorder %s96, %s98
      %p105 = scmp.eq.s32.totalorder %s32, 1
      %p106 = por %p104, %p105
      %p107 = scmp.ne.s32.totalorder %s98, %s99
      %p108 = scmp.eq.s32.totalorder %s32, 0
      %p109 = por %p107, %p108
      %p110 = scmp.ne.s32.totalorder %s98, %s99
      %p111 = scmp.eq.s32.totalorder %s33, 1
      %p112 = por %p110, %p111
      %p114 = scmp.ne.s32.totalorder %s99, %s113
      %p115 = scmp.eq.s32.totalorder %s33, 0
      %p116 = por %p114, %p115
      %s118 = sadd.s32 %s117, 1
      %p121 = scmp.eq.s32.totalorder %s27, 1
      %p122 = scmp.ne.s32.totalorder %s117, %s119
      %p123 = scmp.eq.s32.totalorder %s27, 0
      %p124 = por %p122, %p123
      %p125 = scmp.ne.s32.totalorder %s117, %s119
      %p126 = scmp.eq.s32.totalorder %s32, 1
      %p127 = por %p125, %p126
      %p128 = scmp.ne.s32.totalorder %s119, %s120
      %p129 = scmp.eq.s32.totalorder %s32, 0
      %p130 = por %p128, %p129
      %p131 = scmp.ne.s32.totalorder %s119, %s120
      %p132 = scmp.eq.s32.totalorder %s33, 1
      %p133 = por %p131, %p132
      %p135 = scmp.ne.s32.totalorder %s120, %s134
      %p136 = scmp.eq.s32.totalorder %s33, 0
      %p137 = por %p135, %p136
      %s139 = sadd.s32 %s138, 1
      %p142 = scmp.eq.s32.totalorder %s27, 1
      %p143 = scmp.ne.s32.totalorder %s138, %s140
      %p144 = scmp.eq.s32.totalorder %s27, 0
      %p145 = por %p143, %p144
      %p146 = scmp.ne.s32.totalorder %s138, %s140
      %p147 = scmp.eq.s32.totalorder %s32, 1
      %p148 = por %p146, %p147
      %p149 = scmp.ne.s32.totalorder %s140, %s141
      %p150 = scmp.eq.s32.totalorder %s32, 0
      %p151 = por %p149, %p150
      %p152 = scmp.ne.s32.totalorder %s140, %s141
      %p153 = scmp.eq.s32.totalorder %s33, 1
      %p154 = por %p152, %p153
      %p156 = scmp.ne.s32.totalorder %s141, %s155
      %p157 = scmp.eq.s32.totalorder %s33, 0
      %p158 = por %p156, %p157
      %s159 = ssub.s32 %s35, %s42
      %p160 = scmp.eq.s32.totalorder %s159, 0
      %s162 = sadd.s32 %s161, 1
      %s163 = scalar_select %p160, %s161, %s162
      %p166 = pneg %p160
      %p167 = scmp.eq.s32.totalorder %s27, 1
      %p168 = por %p166, %p167
      %p169 = scmp.ne.s32.totalorder %s161, %s164
      %p170 = scmp.eq.s32.totalorder %s27, 0
      %p171 = por %p169, %p170
      %p172 = scmp.ne.s32.totalorder %s161, %s164
      %p173 = scmp.eq.s32.totalorder %s32, 1
      %p174 = por %p172, %p173
      %p175 = scmp.ne.s32.totalorder %s164, %s165
      %p176 = scmp.eq.s32.totalorder %s32, 0
      %p177 = por %p175, %p176
      %p178 = scmp.ne.s32.totalorder %s164, %s165
      %p179 = scmp.eq.s32.totalorder %s33, 1
      %p180 = por %p178, %p179
      %p182 = scmp.ne.s32.totalorder %s165, %s181
      %p183 = scmp.eq.s32.totalorder %s33, 0
      %p184 = por %p182, %p183
      %s185 = ssub.s32 %s35, %s42
      %p186 = scmp.eq.s32.totalorder %s185, 0
      %s188 = sadd.s32 %s187, 1
      %s189 = scalar_select %p186, %s187, %s188
      %p192 = pneg %p186
      %p193 = scmp.eq.s32.totalorder %s27, 1
      %p194 = por %p192, %p193
      %p195 = scmp.ne.s32.totalorder %s187, %s190
      %p196 = scmp.eq.s32.totalorder %s27, 0
      %p197 = por %p195, %p196
      %p198 = scmp.ne.s32.totalorder %s187, %s190
      %p199 = scmp.eq.s32.totalorder %s32, 1
      %p200 = por %p198, %p199
      %p201 = scmp.ne.s32.totalorder %s190, %s191
      %p202 = scmp.eq.s32.totalorder %s32, 0
      %p203 = por %p201, %p202
      %p204 = scmp.ne.s32.totalorder %s190, %s191
      %p205 = scmp.eq.s32.totalorder %s33, 1
      %p206 = por %p204, %p205
      %p208 = scmp.ne.s32.totalorder %s191, %s207
      %p209 = scmp.eq.s32.totalorder %s33, 0
      %p210 = por %p208, %p209
      %s211 = ssub.s32 %s34, %s46
      %s212 = ssub.s32 %s35, %s42
      %s213 = sor.u32 %s211, %s212
      %p214 = scmp.eq.s32.totalorder %s213, 0
      %s216 = sadd.s32 %s215, 1
      %s217 = scalar_select %p214, %s215, %s216
      %p220 = pneg %p214
      %p221 = scmp.eq.s32.totalorder %s27, 1
      %p222 = por %p220, %p221
      %p223 = scmp.ne.s32.totalorder %s215, %s218
      %p224 = scmp.eq.s32.totalorder %s27, 0
      %p225 = por %p223, %p224
      %p226 = scmp.ne.s32.totalorder %s215, %s218
      %p227 = scmp.eq.s32.totalorder %s32, 1
      %p228 = por %p226, %p227
      %p229 = scmp.ne.s32.totalorder %s218, %s219
      %p230 = scmp.eq.s32.totalorder %s32, 0
      %p231 = por %p229, %p230
      %p232 = scmp.ne.s32.totalorder %s218, %s219
      %p233 = scmp.eq.s32.totalorder %s33, 1
      %p234 = por %p232, %p233
      %p236 = scmp.ne.s32.totalorder %s219, %s235
      %p237 = scmp.eq.s32.totalorder %s33, 0
      %p238 = por %p236, %p237
      %s239 = ssub.s32 %s34, %s46
      %s240 = ssub.s32 %s35, %s42
      %s241 = sor.u32 %s239, %s240
      %p242 = scmp.eq.s32.totalorder %s241, 0
      %s244 = sadd.s32 %s243, 1
      %s245 = scalar_select %p242, %s243, %s244
      %p248 = pneg %p242
      %p249 = scmp.eq.s32.totalorder %s27, 1
      %p250 = por %p248, %p249
      %p251 = scmp.ne.s32.totalorder %s243, %s246
      %p252 = scmp.eq.s32.totalorder %s27, 0
      %p253 = por %p251, %p252
      %p254 = scmp.ne.s32.totalorder %s243, %s246
      %p255 = scmp.eq.s32.totalorder %s32, 1
      %p256 = por %p254, %p255
      %p257 = scmp.ne.s32.totalorder %s246, %s247
      %p258 = scmp.eq.s32.totalorder %s32, 0
      %p259 = por %p257, %p258
      %p260 = scmp.ne.s32.totalorder %s246, %s247
      %p261 = scmp.eq.s32.totalorder %s33, 1
      %p262 = por %p260, %p261
      %p264 = scmp.ne.s32.totalorder %s247, %s263
      %p265 = scmp.eq.s32.totalorder %s33, 0
      %p266 = por %p264, %p265
      %s267 = ssub.s32 %s34, %s46
      %s268 = ssub.s32 %s35, %s42
      %s269 = sor.u32 %s267, %s268
      %p270 = scmp.eq.s32.totalorder %s269, 0
      %s272 = sadd.s32 %s271, 1
      %s273 = scalar_select %p270, %s271, %s272
      %p276 = pneg %p270
      %p277 = scmp.eq.s32.totalorder %s27, 1
      %p278 = por %p276, %p277
      %p279 = scmp.ne.s32.totalorder %s271, %s274
      %p280 = scmp.eq.s32.totalorder %s27, 0
      %p281 = por %p279, %p280
      %p282 = scmp.ne.s32.totalorder %s271, %s274
      %p283 = scmp.eq.s32.totalorder %s32, 1
      %p284 = por %p282, %p283
      %p285 = scmp.ne.s32.totalorder %s274, %s275
      %p286 = scmp.eq.s32.totalorder %s32, 0
      %p287 = por %p285, %p286
      %p288 = scmp.ne.s32.totalorder %s274, %s275
      %p289 = scmp.eq.s32.totalorder %s33, 1
      %p290 = por %p288, %p289
      %p292 = scmp.ne.s32.totalorder %s275, %s291
      %p293 = scmp.eq.s32.totalorder %s33, 0
      %p294 = por %p292, %p293
      %p295 = scmp.le.s32.totalorder 1, %s27
      %p296 = scmp.lt.s32.totalorder %s27, 3
      %p297 = pnand %p295, %p296
      %p298 = pneg %p297
      // Predicated region
      $region9: #{tpu_custom_call.1} parent=5 // pred_check
        _
      $region10: #{tpu_custom_call.1} parent=5 // pred_check_branch
        %300 = sbr.rel (%p297) target = $region12
      $region11: #{tpu_custom_call.1} parent=5 // pred_region
        %s301 = ssub.s32 %s27, 1
        // Predicated region
        $region13: #{tpu_custom_call.1} parent=11 // pred_check
          %p302 = pneg %p88
        $region14: #{tpu_custom_call.1} parent=11 // pred_check_branch
          %304 = sbr.rel (%p302) target = $region16
        $region15: #{tpu_custom_call.1} parent=11 // pred_region
          _
        $region16: #{tpu_custom_call.1} parent=11 // pred_fallthru
          _
        // Predicated region
        $region17: #{tpu_custom_call.1} parent=11 // pred_check
          %p305 = pneg %p109
        $region18: #{tpu_custom_call.1} parent=11 // pred_check_branch
          %307 = sbr.rel (%p305) target = $region20
        $region19: #{tpu_custom_call.1} parent=11 // pred_region
          %s309 = ssub.s32 4096, 4096
          %310 = vsyncadd [#allocation6], %s309
          %s311 = sshll.u32 [#allocation5], 4
          %s312 = int_to_ptr.vmem [resolvable:$true] %s311
          %317 = dma.hbm_to_vmem [thread:$0]  %s2, 4096, %s312, [#allocation6], 128, 128, 8
        $region20: #{tpu_custom_call.1} parent=11 // pred_fallthru
          _
        // Predicated region
        $region21: #{tpu_custom_call.1} parent=11 // pred_check
          %p318 = pneg %p130
        $region22: #{tpu_custom_call.1} parent=11 // pred_check_branch
          %320 = sbr.rel (%p318) target = $region24
        $region23: #{tpu_custom_call.1} parent=11 // pred_region
          %s322 = ssub.s32 4096, 4096
          %323 = vsyncadd [#allocation6], %s322
          %s324 = sshll.u32 [#allocation7], 4
          %s325 = int_to_ptr.vmem [resolvable:$true] %s324
          %330 = dma.hbm_to_vmem [thread:$0]  %s3, 4096, %s325, [#allocation6], 128, 128, 8
        $region24: #{tpu_custom_call.1} parent=11 // pred_fallthru
          _
        // Predicated region
        $region25: #{tpu_custom_call.1} parent=11 // pred_check
          %p331 = pneg %p151
        $region26: #{tpu_custom_call.1} parent=11 // pred_check_branch
          %333 = sbr.rel (%p331) target = $region28
        $region27: #{tpu_custom_call.1} parent=11 // pred_region
          %s335 = ssub.s32 4096, 4096
          %336 = vsyncadd [#allocation9], %s335
          %s337 = sshll.u32 [#allocation8], 4
          %s338 = int_to_ptr.vmem [resolvable:$true] %s337
          %343 = dma.hbm_to_vmem [thread:$0]  %s4, 4096, %s338, [#allocation9], 128, 128, 8
        $region28: #{tpu_custom_call.1} parent=11 // pred_fallthru
          _
        // Predicated region
        $region29: #{tpu_custom_call.1} parent=11 // pred_check
          %p344 = pneg %p177
        $region30: #{tpu_custom_call.1} parent=11 // pred_check_branch
          %346 = sbr.rel (%p344) target = $region32
        $region31: #{tpu_custom_call.1} parent=11 // pred_region
          %p347 = scmp.lt.s32.totalorder %s37, 0
          %s348 = scalar_select %p347, %s37, 0
          %s349 = smul.addr %s348, 8
          %s350 = scalar_lea.vmem %s5, %s349
        $region32: #{tpu_custom_call.1} parent=11 // pred_fallthru
          _
        // Predicated region
        $region33: #{tpu_custom_call.1} parent=11 // pred_check
          %p351 = pneg %p203
        $region34: #{tpu_custom_call.1} parent=11 // pred_check_branch
          %353 = sbr.rel (%p351) target = $region36
        $region35: #{tpu_custom_call.1} parent=11 // pred_region
          %p354 = scmp.lt.s32.totalorder %s37, 0
          %s355 = scalar_select %p354, %s37, 0
          %s356 = smul.addr %s355, 8
          %s357 = scalar_lea.vmem %s6, %s356
        $region36: #{tpu_custom_call.1} parent=11 // pred_fallthru
          _
      $region12: #{tpu_custom_call.1} parent=5 // pred_fallthru
        _
      %p358 = scmp.lt.s32.totalorder %s27, 2
      // Predicated region
      $region37: #{tpu_custom_call.1} parent=5 // pred_check
        %p359 = pneg %p358
      $region38: #{tpu_custom_call.1} parent=5 // pred_check_branch
        %361 = sbr.rel (%p359) target = $region40
      $region39: #{tpu_custom_call.1} parent=5 // pred_region
        // Predicated region
        $region41: #{tpu_custom_call.1} parent=39 // pred_check
          %p362 = pneg %p61
        $region42: #{tpu_custom_call.1} parent=39 // pred_check_branch
          %364 = sbr.rel (%p362) target = $region44
        $region43: #{tpu_custom_call.1} parent=39 // pred_region
          %s365 = sand.u32 %s51, 1
          %s366 = scalar_lea.sflag [#allocation3], %s365
          %s367 = sand.u32 %s51, 1
          %s368 = smul.addr %s367, 16
          %s369 = scalar_lea.vmem [#allocation2], %s368
          %s371 = ssub.s32 256, 256
          %372 = vsyncadd %s366, %s371
          %s373 = smul.addr %s35, 2
          %s374 = smul.addr %s34, 2
          %s375 = sadd.s32 %s373, %s374
          %s376 = smul.addr %s375, 128
          %s377 = scalar_lea.hbm %s0, %s376
          %s379 = sshll.u32 %s369, 4
          %s380 = int_to_ptr.vmem [resolvable:$true] %s379
          %382 = dma.hbm_to_vmem [thread:$0]  %s377, 256, %s380, %s366
        $region44: #{tpu_custom_call.1} parent=39 // pred_fallthru
          _
      $region40: #{tpu_custom_call.1} parent=5 // pred_fallthru
        _
      %p383 = scmp.le.s32.totalorder 1, %s27
      %p384 = scmp.lt.s32.totalorder %s27, 3
      %p385 = pnand %p383, %p384
      %p386 = pneg %p385
      // Predicated region
      $region45: #{tpu_custom_call.1} parent=5 // pred_check
        _
      $region46: #{tpu_custom_call.1} parent=5 // pred_check_branch
        %388 = sbr.rel (%p385) target = $region48
      $region47: #{tpu_custom_call.1} parent=5 // pred_region
        %s389 = ssub.s32 %s27, 1
        %s390 = sand.u32 %s54, 1
        %s391 = scalar_lea.sflag [#allocation3], %s390
        %s392 = sand.u32 %s54, 1
        %s393 = smul.addr %s392, 16
        %s394 = scalar_lea.vmem [#allocation2], %s393
        // Predicated region
        $region49: #{tpu_custom_call.1} parent=47 // pred_check
          %p395 = pneg %p67
        $region50: #{tpu_custom_call.1} parent=47 // pred_check_branch
          %397 = sbr.rel (%p395) target = $region52
        $region51: #{tpu_custom_call.1} parent=47 // pred_region
          %398 = dma.done %s391, 256
        $region52: #{tpu_custom_call.1} parent=47 // pred_fallthru
          _
        // Predicated region
        $region53: #{tpu_custom_call.1} parent=47 // pred_check
          %p399 = pneg %p109
        $region54: #{tpu_custom_call.1} parent=47 // pred_check_branch
          %401 = sbr.rel (%p399) target = $region56
        $region55: #{tpu_custom_call.1} parent=47 // pred_region
          %402 = dma.done [#allocation6], 4096
        $region56: #{tpu_custom_call.1} parent=47 // pred_fallthru
          _
        // Predicated region
        $region57: #{tpu_custom_call.1} parent=47 // pred_check
          %p403 = pneg %p130
        $region58: #{tpu_custom_call.1} parent=47 // pred_check_branch
          %405 = sbr.rel (%p403) target = $region60
        $region59: #{tpu_custom_call.1} parent=47 // pred_region
          %406 = dma.done [#allocation6], 4096
        $region60: #{tpu_custom_call.1} parent=47 // pred_fallthru
          _
        // Predicated region
        $region61: #{tpu_custom_call.1} parent=47 // pred_check
          %p407 = pneg %p151
        $region62: #{tpu_custom_call.1} parent=47 // pred_check_branch
          %409 = sbr.rel (%p407) target = $region64
        $region63: #{tpu_custom_call.1} parent=47 // pred_region
          %410 = dma.done [#allocation9], 4096
        $region64: #{tpu_custom_call.1} parent=47 // pred_fallthru
          _
        %s411 = sand.u32 %s54, 1
        %s412 = scalar_lea.sflag [#allocation3], %s411
        %s413 = sand.u32 %s54, 1
        %s414 = smul.addr %s413, 16
        %s415 = scalar_lea.vmem [#allocation2], %s414
        %p416 = pneg %p67
        %p417 = pneg %p64
        %p418 = pneg %p88
        %p419 = pneg %p85
        %p420 = pneg %p109
        %p421 = pneg %p106
        %p422 = pneg %p130
        %p423 = pneg %p127
        %p424 = pneg %p151
        %p425 = pneg %p148
        %p426 = scmp.lt.s32.totalorder %s37, 0
        %s427 = scalar_select %p426, %s37, 0
        %s428 = smul.addr %s427, 8
        %s429 = scalar_lea.vmem %s5, %s428
        %p430 = pneg %p177
        %p431 = pneg %p174
        %p432 = scmp.lt.s32.totalorder %s37, 0
        %s433 = scalar_select %p432, %s37, 0
        %s434 = smul.addr %s433, 8
        %s435 = scalar_lea.vmem %s6, %s434
        %p436 = pneg %p203
        %p437 = pneg %p200
        %p438 = pneg %p231
        %p439 = pneg %p228
        %s440 = sand.u32 %s218, 1
        %s441 = scalar_lea.sflag [#allocation4], %s440
        %s442 = sand.u32 %s218, 1
        %s443 = smul.addr %s442, 8
        %s444 = scalar_lea.vmem [#allocation10], %s443
        %p445 = pneg %p259
        %p446 = pneg %p256
        %s447 = sand.u32 %s32, 1
        %s448 = scalar_lea.sflag [#allocation12], %s447
        %s449 = sand.u32 %s246, 1
        %s450 = smul.addr %s449, 8
        %s451 = scalar_lea.vmem [#allocation11], %s450
        %p452 = pneg %p287
        %p453 = pneg %p284
        %s454 = sand.u32 %s32, 1
        %s455 = scalar_lea.sflag [#allocation12], %s454
        %s456 = sand.u32 %s274, 1
        %s457 = smul.addr %s456, 8
        %s458 = scalar_lea.vmem [#allocation13], %s457
        %p459 = scmp.lt.s32.totalorder %s37, 0
        %s460 = scalar_select %p459, %s37, 0
        %s461 = smul.addr %s460, 8
        %s462 = scalar_lea.vmem %s5, %s461
        %p463 = scmp.lt.s32.totalorder %s37, 0
        %s464 = scalar_select %p463, %s37, 0
        %s465 = smul.addr %s464, 8
        %s466 = scalar_lea.vmem %s6, %s465
        %v467 = vld [vmem:[%s394] sm:$0xff]
        %v468 = vld [vmem:[%s394 + $0x8] sm:$0xff]
        %v469 = vmul.f32 %v467, %v467
        %v470 = vmul.f32 %v468, %v468
        %v471 = vadd.f32 %v469, %v470
        %472 = vadd.xlane.f32.xlu0 %v471
        %v473 = vpop.xlane.xlu0 %472
        %v474 = vrcp.pop 256.0
        %v475 = vmul.f32 %v473, %v474
        %v476 = vadd.f32 %v475, 1e-05
        %v477 = vrsqrt.pop %v476
        %v478 = vmul.f32 %v476, %v477
        %vm479 = vcmp.eq.f32.partialorder %v476, inf
        %v480 = vsel %vm479, %v476, %v478
        %vm481 = vcmp.eq.f32.partialorder %v476, 0.0
        %v482 = vand.u32 %v476, 2147483648
        %v483 = vsel %vm481, %v482, %v480
        %v484 = vmul.f32 %v467, %v483
        %v485 = vmul.f32 %v468, %v483
        %v486 = vld [vmem:[%s1] sm:$0x3]
        %v488 = vlaneseq
        %v489 = vshrl.u32 %v488, 7
        %v490 = vsub.s32 0, %v489
        %v491 = vrot.slane %v486, %v490
        %v492 = vlaneseq
        %v493 = vshrl.u32 %v492, 7
        %v494 = vsub.s32 1, %v493
        %v495 = vrot.slane %v486, %v494
        %v498 = vmul.f32 %v484, %v491
        %v499 = vmul.f32 %v485, %v495
        %v500 = vpack.c.bf16 %v498, %v498
        %v501 = vpack.c.bf16 %v499, %v499
        %v502 = vld [vmem:[#allocation5] sm:$0xff]
        %v503 = vld [vmem:[#allocation5 + $0x8] sm:$0xff]
        %v504 = vld [vmem:[#allocation5 + $0x10] sm:$0xff]
        %v505 = vld [vmem:[#allocation5 + $0x18] sm:$0xff]
        %v506 = vld [vmem:[#allocation5 + $0x20] sm:$0xff]
        %v507 = vld [vmem:[#allocation5 + $0x28] sm:$0xff]
        %v508 = vld [vmem:[#allocation5 + $0x30] sm:$0xff]
        %v509 = vld [vmem:[#allocation5 + $0x38] sm:$0xff]
        %v510 = vld [vmem:[#allocation5 + $0x40] sm:$0xff]
        %v511 = vld [vmem:[#allocation5 + $0x48] sm:$0xff]
        %v512 = vld [vmem:[#allocation5 + $0x50] sm:$0xff]
        %v513 = vld [vmem:[#allocation5 + $0x58] sm:$0xff]
        %v514 = vld [vmem:[#allocation5 + $0x60] sm:$0xff]
        %v515 = vld [vmem:[#allocation5 + $0x68] sm:$0xff]
        %v516 = vld [vmem:[#allocation5 + $0x70] sm:$0xff]
        %v517 = vld [vmem:[#allocation5 + $0x78] sm:$0xff]
        %v518 = vld [vmem:[#allocation5 + $0x80] sm:$0xff]
        %v519 = vld [vmem:[#allocation5 + $0x88] sm:$0xff]
        %v520 = vld [vmem:[#allocation5 + $0x90] sm:$0xff]
        %v521 = vld [vmem:[#allocation5 + $0x98] sm:$0xff]
        %v522 = vld [vmem:[#allocation5 + $0xa0] sm:$0xff]
        %v523 = vld [vmem:[#allocation5 + $0xa8] sm:$0xff]
        %v524 = vld [vmem:[#allocation5 + $0xb0] sm:$0xff]
        %v525 = vld [vmem:[#allocation5 + $0xb8] sm:$0xff]
        %v526 = vld [vmem:[#allocation5 + $0xc0] sm:$0xff]
        %v527 = vld [vmem:[#allocation5 + $0xc8] sm:$0xff]
        %v528 = vld [vmem:[#allocation5 + $0xd0] sm:$0xff]
        %v529 = vld [vmem:[#allocation5 + $0xd8] sm:$0xff]
        %v530 = vld [vmem:[#allocation5 + $0xe0] sm:$0xff]
        %v531 = vld [vmem:[#allocation5 + $0xe8] sm:$0xff]
        %v532 = vld [vmem:[#allocation5 + $0xf0] sm:$0xff]
        %v533 = vld [vmem:[#allocation5 + $0xf8] sm:$0xff]
        %v566 = vunpack.c.l.b16 %v502
        %v567 = vunpack.c.h.b16 %v502
        %v568 = vunpack.c.l.b16 %v503
        %v569 = vunpack.c.h.b16 %v503
        %v570 = vunpack.c.l.b16 %v504
        %v571 = vunpack.c.h.b16 %v504
        %v572 = vunpack.c.l.b16 %v505
        %v573 = vunpack.c.h.b16 %v505
        %v574 = vunpack.c.l.b16 %v506
        %v575 = vunpack.c.h.b16 %v506
        %v576 = vunpack.c.l.b16 %v507
        %v577 = vunpack.c.h.b16 %v507
        %v578 = vunpack.c.l.b16 %v508
        %v579 = vunpack.c.h.b16 %v508
        %v580 = vunpack.c.l.b16 %v509
        %v581 = vunpack.c.h.b16 %v509
        %v582 = vunpack.c.l.b16 %v510
        %v583 = vunpack.c.h.b16 %v510
        %v584 = vunpack.c.l.b16 %v511
        %v585 = vunpack.c.h.b16 %v511
        %v586 = vunpack.c.l.b16 %v512
        %v587 = vunpack.c.h.b16 %v512
        %v588 = vunpack.c.l.b16 %v513
        %v589 = vunpack.c.h.b16 %v513
        %v590 = vunpack.c.l.b16 %v514
        %v591 = vunpack.c.h.b16 %v514
        %v592 = vunpack.c.l.b16 %v515
        %v593 = vunpack.c.h.b16 %v515
        %v594 = vunpack.c.l.b16 %v516
        %v595 = vunpack.c.h.b16 %v516
        %v596 = vunpack.c.l.b16 %v517
        %v597 = vunpack.c.h.b16 %v517
        %v598 = vunpack.c.l.b16 %v518
        %v599 = vunpack.c.h.b16 %v518
        %v600 = vunpack.c.l.b16 %v519
        %v601 = vunpack.c.h.b16 %v519
        %v602 = vunpack.c.l.b16 %v520
        %v603 = vunpack.c.h.b16 %v520
        %v604 = vunpack.c.l.b16 %v521
        %v605 = vunpack.c.h.b16 %v521
        %v606 = vunpack.c.l.b16 %v522
        %v607 = vunpack.c.h.b16 %v522
        %v608 = vunpack.c.l.b16 %v523
        %v609 = vunpack.c.h.b16 %v523
        %v610 = vunpack.c.l.b16 %v524
        %v611 = vunpack.c.h.b16 %v524
        %v612 = vunpack.c.l.b16 %v525
        %v613 = vunpack.c.h.b16 %v525
        %v614 = vunpack.c.l.b16 %v526
        %v615 = vunpack.c.h.b16 %v526
        %v616 = vunpack.c.l.b16 %v527
        %v617 = vunpack.c.h.b16 %v527
        %v618 = vunpack.c.l.b16 %v528
        %v619 = vunpack.c.h.b16 %v528
        %v620 = vunpack.c.l.b16 %v529
        %v621 = vunpack.c.h.b16 %v529
        %v622 = vunpack.c.l.b16 %v530
        %v623 = vunpack.c.h.b16 %v530
        %v624 = vunpack.c.l.b16 %v531
        %v625 = vunpack.c.h.b16 %v531
        %v626 = vunpack.c.l.b16 %v532
        %v627 = vunpack.c.h.b16 %v532
        %v628 = vunpack.c.l.b16 %v533
        %v629 = vunpack.c.h.b16 %v533
        %v630 = vpack.c.b16 %v568, %v566
        %v631 = vpack.c.b16 %v569, %v567
        %v632 = vpack.c.b16 %v572, %v570
        %v633 = vpack.c.b16 %v573, %v571
        %v634 = vpack.c.b16 %v576, %v574
        %v635 = vpack.c.b16 %v577, %v575
        %v636 = vpack.c.b16 %v580, %v578
        %v637 = vpack.c.b16 %v581, %v579
        %v638 = vpack.c.b16 %v584, %v582
        %v639 = vpack.c.b16 %v585, %v583
        %v640 = vpack.c.b16 %v588, %v586
        %v641 = vpack.c.b16 %v589, %v587
        %v642 = vpack.c.b16 %v592, %v590
        %v643 = vpack.c.b16 %v593, %v591
        %v644 = vpack.c.b16 %v596, %v594
        %v645 = vpack.c.b16 %v597, %v595
        %v646 = vpack.c.b16 %v600, %v598
        %v647 = vpack.c.b16 %v601, %v599
        %v648 = vpack.c.b16 %v604, %v602
        %v649 = vpack.c.b16 %v605, %v603
        %v650 = vpack.c.b16 %v608, %v606
        %v651 = vpack.c.b16 %v609, %v607
        %v652 = vpack.c.b16 %v612, %v610
        %v653 = vpack.c.b16 %v613, %v611
        %v654 = vpack.c.b16 %v616, %v614
        %v655 = vpack.c.b16 %v617, %v615
        %v656 = vpack.c.b16 %v620, %v618
        %v657 = vpack.c.b16 %v621, %v619
        %v658 = vpack.c.b16 %v624, %v622
        %v659 = vpack.c.b16 %v625, %v623
        %v660 = vpack.c.b16 %v628, %v626
        %v661 = vpack.c.b16 %v629, %v627
        %694 = vmatprep.subr.bf16.mxu0 %v631
        %695 = vmatpush1.bf16.msra.mxu0 %v630
        %696 = vmatprep.subr.bf16.mxu0 %v633
        %697 = vmatpush1.bf16.msra.mxu0 %v632
        %698 = vmatprep.subr.bf16.mxu0 %v635
        %699 = vmatpush1.bf16.msra.mxu0 %v634
        %700 = vmatprep.subr.bf16.mxu0 %v637
        %701 = vmatpush1.bf16.msra.mxu0 %v636
        %702 = vmatprep.subr.bf16.mxu0 %v639
        %703 = vmatpush1.bf16.msra.mxu0 %v638
        %704 = vmatprep.subr.bf16.mxu0 %v641
        %705 = vmatpush1.bf16.msra.mxu0 %v640
        %706 = vmatprep.subr.bf16.mxu0 %v643
        %707 = vmatpush1.bf16.msra.mxu0 %v642
        %708 = vmatprep.subr.bf16.mxu0 %v645
        %709 = vmatpush1.bf16.msra.mxu0 %v644
        %710 = vmatprep.subr.bf16.mxu0 %v647
        %711 = vmatpush1.bf16.msra.mxu0 %v646
        %712 = vmatprep.subr.bf16.mxu0 %v649
        %713 = vmatpush1.bf16.msra.mxu0 %v648
        %714 = vmatprep.subr.bf16.mxu0 %v651
        %715 = vmatpush1.bf16.msra.mxu0 %v650
        %716 = vmatprep.subr.bf16.mxu0 %v653
        %717 = vmatpush1.bf16.msra.mxu0 %v652
        %718 = vmatprep.subr.bf16.mxu0 %v655
        %719 = vmatpush1.bf16.msra.mxu0 %v654
        %720 = vmatprep.subr.bf16.mxu0 %v657
        %721 = vmatpush1.bf16.msra.mxu0 %v656
        %722 = vmatprep.subr.bf16.mxu0 %v659
        %723 = vmatpush1.bf16.msra.mxu0 %v658
        %724 = vmatprep.subr.bf16.mxu0 %v661
        %725 = vmatpush1.bf16.msra.mxu0 %v660
        %726 = vmatprep.mubr.bf16.mxu0 %v501
        %727 = vmatmul.mubr.bf16.gmra.mrb[0].mxu0 %v500
        %v728 = vpop.f32.mrb[0].mxu0
        %v729 = vadd.f32 0.0, %v728
        %v730 = vpop.f32.mrb[0].mxu0
        %v731 = vadd.f32 0.0, %v730
        %v732 = vpop.f32.mrb[0].mxu0
        %v733 = vpop.f32.mrb[0].mxu0
        %734 = vdwg.mxu0
        %v735 = vld [vmem:[#allocation7] sm:$0xff]
        %v736 = vld [vmem:[#allocation7 + $0x8] sm:$0xff]
        %v737 = vld [vmem:[#allocation7 + $0x10] sm:$0xff]
        %v738 = vld [vmem:[#allocation7 + $0x18] sm:$0xff]
        %v739 = vld [vmem:[#allocation7 + $0x20] sm:$0xff]
        %v740 = vld [vmem:[#allocation7 + $0x28] sm:$0xff]
        %v741 = vld [vmem:[#allocation7 + $0x30] sm:$0xff]
        %v742 = vld [vmem:[#allocation7 + $0x38] sm:$0xff]
        %v743 = vld [vmem:[#allocation7 + $0x40] sm:$0xff]
        %v744 = vld [vmem:[#allocation7 + $0x48] sm:$0xff]
        %v745 = vld [vmem:[#allocation7 + $0x50] sm:$0xff]
        %v746 = vld [vmem:[#allocation7 + $0x58] sm:$0xff]
        %v747 = vld [vmem:[#allocation7 + $0x60] sm:$0xff]
        %v748 = vld [vmem:[#allocation7 + $0x68] sm:$0xff]
        %v749 = vld [vmem:[#allocation7 + $0x70] sm:$0xff]
        %v750 = vld [vmem:[#allocation7 + $0x78] sm:$0xff]
        %v751 = vld [vmem:[#allocation7 + $0x80] sm:$0xff]
        %v752 = vld [vmem:[#allocation7 + $0x88] sm:$0xff]
        %v753 = vld [vmem:[#allocation7 + $0x90] sm:$0xff]
        %v754 = vld [vmem:[#allocation7 + $0x98] sm:$0xff]
        %v755 = vld [vmem:[#allocation7 + $0xa0] sm:$0xff]
        %v756 = vld [vmem:[#allocation7 + $0xa8] sm:$0xff]
        %v757 = vld [vmem:[#allocation7 + $0xb0] sm:$0xff]
        %v758 = vld [vmem:[#allocation7 + $0xb8] sm:$0xff]
        %v759 = vld [vmem:[#allocation7 + $0xc0] sm:$0xff]
        %v760 = vld [vmem:[#allocation7 + $0xc8] sm:$0xff]
        %v761 = vld [vmem:[#allocation7 + $0xd0] sm:$0xff]
        %v762 = vld [vmem:[#allocation7 + $0xd8] sm:$0xff]
        %v763 = vld [vmem:[#allocation7 + $0xe0] sm:$0xff]
        %v764 = vld [vmem:[#allocation7 + $0xe8] sm:$0xff]
        %v765 = vld [vmem:[#allocation7 + $0xf0] sm:$0xff]
        %v766 = vld [vmem:[#allocation7 + $0xf8] sm:$0xff]
        %v799 = vunpack.c.l.b16 %v735
        %v800 = vunpack.c.h.b16 %v735
        %v801 = vunpack.c.l.b16 %v736
        %v802 = vunpack.c.h.b16 %v736
        %v803 = vunpack.c.l.b16 %v737
        %v804 = vunpack.c.h.b16 %v737
        %v805 = vunpack.c.l.b16 %v738
        %v806 = vunpack.c.h.b16 %v738
        %v807 = vunpack.c.l.b16 %v739
        %v808 = vunpack.c.h.b16 %v739
        %v809 = vunpack.c.l.b16 %v740
        %v810 = vunpack.c.h.b16 %v740
        %v811 = vunpack.c.l.b16 %v741
        %v812 = vunpack.c.h.b16 %v741
        %v813 = vunpack.c.l.b16 %v742
        %v814 = vunpack.c.h.b16 %v742
        %v815 = vunpack.c.l.b16 %v743
        %v816 = vunpack.c.h.b16 %v743
        %v817 = vunpack.c.l.b16 %v744
        %v818 = vunpack.c.h.b16 %v744
        %v819 = vunpack.c.l.b16 %v745
        %v820 = vunpack.c.h.b16 %v745
        %v821 = vunpack.c.l.b16 %v746
        %v822 = vunpack.c.h.b16 %v746
        %v823 = vunpack.c.l.b16 %v747
        %v824 = vunpack.c.h.b16 %v747
        %v825 = vunpack.c.l.b16 %v748
        %v826 = vunpack.c.h.b16 %v748
        %v827 = vunpack.c.l.b16 %v749
        %v828 = vunpack.c.h.b16 %v749
        %v829 = vunpack.c.l.b16 %v750
        %v830 = vunpack.c.h.b16 %v750
        %v831 = vunpack.c.l.b16 %v751
        %v832 = vunpack.c.h.b16 %v751
        %v833 = vunpack.c.l.b16 %v752
        %v834 = vunpack.c.h.b16 %v752
        %v835 = vunpack.c.l.b16 %v753
        %v836 = vunpack.c.h.b16 %v753
        %v837 = vunpack.c.l.b16 %v754
        %v838 = vunpack.c.h.b16 %v754
        %v839 = vunpack.c.l.b16 %v755
        %v840 = vunpack.c.h.b16 %v755
        %v841 = vunpack.c.l.b16 %v756
        %v842 = vunpack.c.h.b16 %v756
        %v843 = vunpack.c.l.b16 %v757
        %v844 = vunpack.c.h.b16 %v757
        %v845 = vunpack.c.l.b16 %v758
        %v846 = vunpack.c.h.b16 %v758
        %v847 = vunpack.c.l.b16 %v759
        %v848 = vunpack.c.h.b16 %v759
        %v849 = vunpack.c.l.b16 %v760
        %v850 = vunpack.c.h.b16 %v760
        %v851 = vunpack.c.l.b16 %v761
        %v852 = vunpack.c.h.b16 %v761
        %v853 = vunpack.c.l.b16 %v762
        %v854 = vunpack.c.h.b16 %v762
        %v855 = vunpack.c.l.b16 %v763
        %v856 = vunpack.c.h.b16 %v763
        %v857 = vunpack.c.l.b16 %v764
        %v858 = vunpack.c.h.b16 %v764
        %v859 = vunpack.c.l.b16 %v765
        %v860 = vunpack.c.h.b16 %v765
        %v861 = vunpack.c.l.b16 %v766
        %v862 = vunpack.c.h.b16 %v766
        %v863 = vpack.c.b16 %v801, %v799
        %v864 = vpack.c.b16 %v802, %v800
        %v865 = vpack.c.b16 %v805, %v803
        %v866 = vpack.c.b16 %v806, %v804
        %v867 = vpack.c.b16 %v809, %v807
        %v868 = vpack.c.b16 %v810, %v808
        %v869 = vpack.c.b16 %v813, %v811
        %v870 = vpack.c.b16 %v814, %v812
        %v871 = vpack.c.b16 %v817, %v815
        %v872 = vpack.c.b16 %v818, %v816
        %v873 = vpack.c.b16 %v821, %v819
        %v874 = vpack.c.b16 %v822, %v820
        %v875 = vpack.c.b16 %v825, %v823
        %v876 = vpack.c.b16 %v826, %v824
        %v877 = vpack.c.b16 %v829, %v827
        %v878 = vpack.c.b16 %v830, %v828
        %v879 = vpack.c.b16 %v833, %v831
        %v880 = vpack.c.b16 %v834, %v832
        %v881 = vpack.c.b16 %v837, %v835
        %v882 = vpack.c.b16 %v838, %v836
        %v883 = vpack.c.b16 %v841, %v839
        %v884 = vpack.c.b16 %v842, %v840
        %v885 = vpack.c.b16 %v845, %v843
        %v886 = vpack.c.b16 %v846, %v844
        %v887 = vpack.c.b16 %v849, %v847
        %v888 = vpack.c.b16 %v850, %v848
        %v889 = vpack.c.b16 %v853, %v851
        %v890 = vpack.c.b16 %v854, %v852
        %v891 = vpack.c.b16 %v857, %v855
        %v892 = vpack.c.b16 %v858, %v856
        %v893 = vpack.c.b16 %v861, %v859
        %v894 = vpack.c.b16 %v862, %v860
        %927 = vmatprep.subr.bf16.mxu0 %v864
        %928 = vmatpush1.bf16.msra.mxu0 %v863
        %929 = vmatprep.subr.bf16.mxu0 %v866
        %930 = vmatpush1.bf16.msra.mxu0 %v865
        %931 = vmatprep.subr.bf16.mxu0 %v868
        %932 = vmatpush1.bf16.msra.mxu0 %v867
        %933 = vmatprep.subr.bf16.mxu0 %v870
        %934 = vmatpush1.bf16.msra.mxu0 %v869
        %935 = vmatprep.subr.bf16.mxu0 %v872
        %936 = vmatpush1.bf16.msra.mxu0 %v871
        %937 = vmatprep.subr.bf16.mxu0 %v874
        %938 = vmatpush1.bf16.msra.mxu0 %v873
        %939 = vmatprep.subr.bf16.mxu0 %v876
        %940 = vmatpush1.bf16.msra.mxu0 %v875
        %941 = vmatprep.subr.bf16.mxu0 %v878
        %942 = vmatpush1.bf16.msra.mxu0 %v877
        %943 = vmatprep.subr.bf16.mxu0 %v880
        %944 = vmatpush1.bf16.msra.mxu0 %v879
        %945 = vmatprep.subr.bf16.mxu0 %v882
        %946 = vmatpush1.bf16.msra.mxu0 %v881
        %947 = vmatprep.subr.bf16.mxu0 %v884
        %948 = vmatpush1.bf16.msra.mxu0 %v883
        %949 = vmatprep.subr.bf16.mxu0 %v886
        %950 = vmatpush1.bf16.msra.mxu0 %v885
        %951 = vmatprep.subr.bf16.mxu0 %v888
        %952 = vmatpush1.bf16.msra.mxu0 %v887
        %953 = vmatprep.subr.bf16.mxu0 %v890
        %954 = vmatpush1.bf16.msra.mxu0 %v889
        %955 = vmatprep.subr.bf16.mxu0 %v892
        %956 = vmatpush1.bf16.msra.mxu0 %v891
        %957 = vmatprep.subr.bf16.mxu0 %v894
        %958 = vmatpush1.bf16.msra.mxu0 %v893
        %959 = vmatprep.mubr.bf16.mxu0 %v501
        %960 = vmatmul.mubr.bf16.gmra.mrb[0].mxu0 %v500
        %v961 = vpop.f32.mrb[0].mxu0
        %v962 = vadd.f32 0.0, %v961
        %v963 = vpop.f32.mrb[0].mxu0
        %v964 = vadd.f32 0.0, %v963
        %v965 = vpop.f32.mrb[0].mxu0
        %v966 = vpop.f32.mrb[0].mxu0
        %967 = vdwg.mxu0
        %v968 = vld [vmem:[#allocation8] sm:$0xff]
        %v969 = vld [vmem:[#allocation8 + $0x8] sm:$0xff]
        %v970 = vld [vmem:[#allocation8 + $0x10] sm:$0xff]
        %v971 = vld [vmem:[#allocation8 + $0x18] sm:$0xff]
        %v972 = vld [vmem:[#allocation8 + $0x20] sm:$0xff]
        %v973 = vld [vmem:[#allocation8 + $0x28] sm:$0xff]
        %v974 = vld [vmem:[#allocation8 + $0x30] sm:$0xff]
        %v975 = vld [vmem:[#allocation8 + $0x38] sm:$0xff]
        %v976 = vld [vmem:[#allocation8 + $0x40] sm:$0xff]
        %v977 = vld [vmem:[#allocation8 + $0x48] sm:$0xff]
        %v978 = vld [vmem:[#allocation8 + $0x50] sm:$0xff]
        %v979 = vld [vmem:[#allocation8 + $0x58] sm:$0xff]
        %v980 = vld [vmem:[#allocation8 + $0x60] sm:$0xff]
        %v981 = vld [vmem:[#allocation8 + $0x68] sm:$0xff]
        %v982 = vld [vmem:[#allocation8 + $0x70] sm:$0xff]
        %v983 = vld [vmem:[#allocation8 + $0x78] sm:$0xff]
        %v984 = vld [vmem:[#allocation8 + $0x80] sm:$0xff]
        %v985 = vld [vmem:[#allocation8 + $0x88] sm:$0xff]
        %v986 = vld [vmem:[#allocation8 + $0x90] sm:$0xff]
        %v987 = vld [vmem:[#allocation8 + $0x98] sm:$0xff]
        %v988 = vld [vmem:[#allocation8 + $0xa0] sm:$0xff]
        %v989 = vld [vmem:[#allocation8 + $0xa8] sm:$0xff]
        %v990 = vld [vmem:[#allocation8 + $0xb0] sm:$0xff]
        %v991 = vld [vmem:[#allocation8 + $0xb8] sm:$0xff]
        %v992 = vld [vmem:[#allocation8 + $0xc0] sm:$0xff]
        %v993 = vld [vmem:[#allocation8 + $0xc8] sm:$0xff]
        %v994 = vld [vmem:[#allocation8 + $0xd0] sm:$0xff]
        %v995 = vld [vmem:[#allocation8 + $0xd8] sm:$0xff]
        %v996 = vld [vmem:[#allocation8 + $0xe0] sm:$0xff]
        %v997 = vld [vmem:[#allocation8 + $0xe8] sm:$0xff]
        %v998 = vld [vmem:[#allocation8 + $0xf0] sm:$0xff]
        %v999 = vld [vmem:[#allocation8 + $0xf8] sm:$0xff]
        %v1032 = vunpack.c.l.b16 %v968
        %v1033 = vunpack.c.h.b16 %v968
        %v1034 = vunpack.c.l.b16 %v969
        %v1035 = vunpack.c.h.b16 %v969
        %v1036 = vunpack.c.l.b16 %v970
        %v1037 = vunpack.c.h.b16 %v970
        %v1038 = vunpack.c.l.b16 %v971
        %v1039 = vunpack.c.h.b16 %v971
        %v1040 = vunpack.c.l.b16 %v972
        %v1041 = vunpack.c.h.b16 %v972
        %v1042 = vunpack.c.l.b16 %v973
        %v1043 = vunpack.c.h.b16 %v973
        %v1044 = vunpack.c.l.b16 %v974
        %v1045 = vunpack.c.h.b16 %v974
        %v1046 = vunpack.c.l.b16 %v975
        %v1047 = vunpack.c.h.b16 %v975
        %v1048 = vunpack.c.l.b16 %v976
        %v1049 = vunpack.c.h.b16 %v976
        %v1050 = vunpack.c.l.b16 %v977
        %v1051 = vunpack.c.h.b16 %v977
        %v1052 = vunpack.c.l.b16 %v978
        %v1053 = vunpack.c.h.b16 %v978
        %v1054 = vunpack.c.l.b16 %v979
        %v1055 = vunpack.c.h.b16 %v979
        %v1056 = vunpack.c.l.b16 %v980
        %v1057 = vunpack.c.h.b16 %v980
        %v1058 = vunpack.c.l.b16 %v981
        %v1059 = vunpack.c.h.b16 %v981
        %v1060 = vunpack.c.l.b16 %v982
        %v1061 = vunpack.c.h.b16 %v982
        %v1062 = vunpack.c.l.b16 %v983
        %v1063 = vunpack.c.h.b16 %v983
        %v1064 = vunpack.c.l.b16 %v984
        %v1065 = vunpack.c.h.b16 %v984
        %v1066 = vunpack.c.l.b16 %v985
        %v1067 = vunpack.c.h.b16 %v985
        %v1068 = vunpack.c.l.b16 %v986
        %v1069 = vunpack.c.h.b16 %v986
        %v1070 = vunpack.c.l.b16 %v987
        %v1071 = vunpack.c.h.b16 %v987
        %v1072 = vunpack.c.l.b16 %v988
        %v1073 = vunpack.c.h.b16 %v988
        %v1074 = vunpack.c.l.b16 %v989
        %v1075 = vunpack.c.h.b16 %v989
        %v1076 = vunpack.c.l.b16 %v990
        %v1077 = vunpack.c.h.b16 %v990
        %v1078 = vunpack.c.l.b16 %v991
        %v1079 = vunpack.c.h.b16 %v991
        %v1080 = vunpack.c.l.b16 %v992
        %v1081 = vunpack.c.h.b16 %v992
        %v1082 = vunpack.c.l.b16 %v993
        %v1083 = vunpack.c.h.b16 %v993
        %v1084 = vunpack.c.l.b16 %v994
        %v1085 = vunpack.c.h.b16 %v994
        %v1086 = vunpack.c.l.b16 %v995
        %v1087 = vunpack.c.h.b16 %v995
        %v1088 = vunpack.c.l.b16 %v996
        %v1089 = vunpack.c.h.b16 %v996
        %v1090 = vunpack.c.l.b16 %v997
        %v1091 = vunpack.c.h.b16 %v997
        %v1092 = vunpack.c.l.b16 %v998
        %v1093 = vunpack.c.h.b16 %v998
        %v1094 = vunpack.c.l.b16 %v999
        %v1095 = vunpack.c.h.b16 %v999
        %v1096 = vpack.c.b16 %v1034, %v1032
        %v1097 = vpack.c.b16 %v1035, %v1033
        %v1098 = vpack.c.b16 %v1038, %v1036
        %v1099 = vpack.c.b16 %v1039, %v1037
        %v1100 = vpack.c.b16 %v1042, %v1040
        %v1101 = vpack.c.b16 %v1043, %v1041
        %v1102 = vpack.c.b16 %v1046, %v1044
        %v1103 = vpack.c.b16 %v1047, %v1045
        %v1104 = vpack.c.b16 %v1050, %v1048
        %v1105 = vpack.c.b16 %v1051, %v1049
        %v1106 = vpack.c.b16 %v1054, %v1052
        %v1107 = vpack.c.b16 %v1055, %v1053
        %v1108 = vpack.c.b16 %v1058, %v1056
        %v1109 = vpack.c.b16 %v1059, %v1057
        %v1110 = vpack.c.b16 %v1062, %v1060
        %v1111 = vpack.c.b16 %v1063, %v1061
        %v1112 = vpack.c.b16 %v1066, %v1064
        %v1113 = vpack.c.b16 %v1067, %v1065
        %v1114 = vpack.c.b16 %v1070, %v1068
        %v1115 = vpack.c.b16 %v1071, %v1069
        %v1116 = vpack.c.b16 %v1074, %v1072
        %v1117 = vpack.c.b16 %v1075, %v1073
        %v1118 = vpack.c.b16 %v1078, %v1076
        %v1119 = vpack.c.b16 %v1079, %v1077
        %v1120 = vpack.c.b16 %v1082, %v1080
        %v1121 = vpack.c.b16 %v1083, %v1081
        %v1122 = vpack.c.b16 %v1086, %v1084
        %v1123 = vpack.c.b16 %v1087, %v1085
        %v1124 = vpack.c.b16 %v1090, %v1088
        %v1125 = vpack.c.b16 %v1091, %v1089
        %v1126 = vpack.c.b16 %v1094, %v1092
        %v1127 = vpack.c.b16 %v1095, %v1093
        %1160 = vmatprep.subr.bf16.mxu0 %v1097
        %1161 = vmatpush1.bf16.msra.mxu0 %v1096
        %1162 = vmatprep.subr.bf16.mxu0 %v1099
        %1163 = vmatpush1.bf16.msra.mxu0 %v1098
        %1164 = vmatprep.subr.bf16.mxu0 %v1101
        %1165 = vmatpush1.bf16.msra.mxu0 %v1100
        %1166 = vmatprep.subr.bf16.mxu0 %v1103
        %1167 = vmatpush1.bf16.msra.mxu0 %v1102
        %1168 = vmatprep.subr.bf16.mxu0 %v1105
        %1169 = vmatpush1.bf16.msra.mxu0 %v1104
        %1170 = vmatprep.subr.bf16.mxu0 %v1107
        %1171 = vmatpush1.bf16.msra.mxu0 %v1106
        %1172 = vmatprep.subr.bf16.mxu0 %v1109
        %1173 = vmatpush1.bf16.msra.mxu0 %v1108
        %1174 = vmatprep.subr.bf16.mxu0 %v1111
        %1175 = vmatpush1.bf16.msra.mxu0 %v1110
        %1176 = vmatprep.subr.bf16.mxu0 %v1113
        %1177 = vmatpush1.bf16.msra.mxu0 %v1112
        %1178 = vmatprep.subr.bf16.mxu0 %v1115
        %1179 = vmatpush1.bf16.msra.mxu0 %v1114
        %1180 = vmatprep.subr.bf16.mxu0 %v1117
        %1181 = vmatpush1.bf16.msra.mxu0 %v1116
        %1182 = vmatprep.subr.bf16.mxu0 %v1119
        %1183 = vmatpush1.bf16.msra.mxu0 %v1118
        %1184 = vmatprep.subr.bf16.mxu0 %v1121
        %1185 = vmatpush1.bf16.msra.mxu0 %v1120
        %1186 = vmatprep.subr.bf16.mxu0 %v1123
        %1187 = vmatpush1.bf16.msra.mxu0 %v1122
        %1188 = vmatprep.subr.bf16.mxu0 %v1125
        %1189 = vmatpush1.bf16.msra.mxu0 %v1124
        %1190 = vmatprep.subr.bf16.mxu0 %v1127
        %1191 = vmatpush1.bf16.msra.mxu0 %v1126
        %1192 = vmatprep.mubr.bf16.mxu0 %v501
        %1193 = vmatmul.mubr.bf16.gmra.mrb[0].mxu0 %v500
        %v1194 = vpop.f32.mrb[0].mxu0
        %v1195 = vadd.f32 0.0, %v1194
        %v1196 = vpop.f32.mrb[0].mxu0
        %v1197 = vadd.f32 0.0, %v1196
        %v1198 = vpop.f32.mrb[0].mxu0
        %v1199 = vpop.f32.mrb[0].mxu0
        %1200 = vdwg.mxu0
        %v1201 = vld [vmem:[%s462] sm:$0xff]
        %v1202 = vld [vmem:[%s466] sm:$0xff]
        %v1203 = vmul.f32 %v729, %v1201
        %1205 = vrot.lane.b32.xlu0 %v1202, 64
        %v1206 = vpop.permute.xlu0 %1205
        %v1208 = vmul.f32 %v729, %v1206
        %1210 = vrot.lane.b32.xlu0 %v1208, 64
        %v1211 = vpop.permute.xlu0 %1210
        %v1213 = vsub.f32 %v1203, %v1211
        %v1214 = vmul.f32 %v729, %v1202
        %1216 = vrot.lane.b32.xlu0 %v1201, 64
        %v1217 = vpop.permute.xlu0 %1216
        %v1219 = vmul.f32 %v729, %v1217
        %1221 = vrot.lane.b32.xlu0 %v1219, 64
        %v1222 = vpop.permute.xlu0 %1221
        %v1224 = vadd.f32 %v1214, %v1222
        %1226 = vrot.lane.b32.xlu0 %v1224, 64
        %v1227 = vpop.permute.xlu0 %1226
        %vm1229 = vcmask 523264
        %v1230 = vsel %vm1229, %v1213, %v1227
        %v1231 = vmul.f32 %v962, %v1201
        %v1232 = vmul.f32 %v962, %v1206
        %1234 = vrot.lane.b32.xlu0 %v1232, 64
        %v1235 = vpop.permute.xlu0 %1234
        %v1237 = vsub.f32 %v1231, %v1235
        %v1238 = vmul.f32 %v962, %v1202
        %v1239 = vmul.f32 %v962, %v1217
        %1241 = vrot.lane.b32.xlu0 %v1239, 64
        %v1242 = vpop.permute.xlu0 %1241
        %v1244 = vadd.f32 %v1238, %v1242
        %1246 = vrot.lane.b32.xlu0 %v1244, 64
        %v1247 = vpop.permute.xlu0 %1246
        %v1249 = vsel %vm1229, %v1237, %v1247
        %v1250 = vmul.f32 %v1230, 0.088388346
        %v1251 = vpack.c.bf16 %v1250, %v1250
        %1252 = vst [vmem:[%s444] sm:$0xf] %v1251
        %v1253 = vpack.c.bf16 %v1249, %v1249
        %1254 = vst [vmem:[%s451] sm:$0xf] %v1253
        %v1255 = vpack.c.bf16 %v1195, %v1195
        %1256 = vst [vmem:[%s458] sm:$0xf] %v1255
        %v1257 = vmul.f32 %v731, %v1201
        %v1258 = vmul.f32 %v731, %v1206
        %1260 = vrot.lane.b32.xlu0 %v1258, 64
        %v1261 = vpop.permute.xlu0 %1260
        %v1263 = vsub.f32 %v1257, %v1261
        %v1264 = vmul.f32 %v731, %v1202
        %v1265 = vmul.f32 %v731, %v1217
        %1267 = vrot.lane.b32.xlu0 %v1265, 64
        %v1268 = vpop.permute.xlu0 %1267
        %v1270 = vadd.f32 %v1264, %v1268
        %1272 = vrot.lane.b32.xlu0 %v1270, 64
        %v1273 = vpop.permute.xlu0 %1272
        %v1275 = vsel %vm1229, %v1263, %v1273
        %v1276 = vmul.f32 %v964, %v1201
        %v1277 = vmul.f32 %v964, %v1206
        %1279 = vrot.lane.b32.xlu0 %v1277, 64
        %v1280 = vpop.permute.xlu0 %1279
        %v1282 = vsub.f32 %v1276, %v1280
        %v1283 = vmul.f32 %v964, %v1202
        %v1284 = vmul.f32 %v964, %v1217
        %1286 = vrot.lane.b32.xlu0 %v1284, 64
        %v1287 = vpop.permute.xlu0 %1286
        %v1289 = vadd.f32 %v1283, %v1287
        %1291 = vrot.lane.b32.xlu0 %v1289, 64
        %v1292 = vpop.permute.xlu0 %1291
        %v1294 = vsel %vm1229, %v1282, %v1292
        %v1295 = vmul.f32 %v1275, 0.088388346
        %v1296 = vpack.c.bf16 %v1295, %v1295
        %s1297 = scalar_lea.vmem %s444, 4 [#allocation10]
        %1298 = vst [vmem:[%s1297] sm:$0xf] %v1296
        %v1299 = vpack.c.bf16 %v1294, %v1294
        %s1300 = scalar_lea.vmem %s451, 4 [#allocation11]
        %1301 = vst [vmem:[%s1300] sm:$0xf] %v1299
        %v1302 = vpack.c.bf16 %v1197, %v1197
        %s1303 = scalar_lea.vmem %s458, 4 [#allocation13]
        %1304 = vst [vmem:[%s1303] sm:$0xf] %v1302
        %s1305 = sand.u32 %s218, 1
        %s1306 = scalar_lea.sflag [#allocation4], %s1305
        %s1307 = sand.u32 %s218, 1
        %s1308 = smul.addr %s1307, 8
        %s1309 = scalar_lea.vmem [#allocation10], %s1308
        %s1310 = sand.u32 %s32, 1
        %s1311 = scalar_lea.sflag [#allocation12], %s1310
        %s1312 = sand.u32 %s246, 1
        %s1313 = smul.addr %s1312, 8
        %s1314 = scalar_lea.vmem [#allocation11], %s1313
        %s1315 = sand.u32 %s32, 1
        %s1316 = scalar_lea.sflag [#allocation12], %s1315
        %s1317 = sand.u32 %s274, 1
        %s1318 = smul.addr %s1317, 8
        %s1319 = scalar_lea.vmem [#allocation13], %s1318
        // Predicated region
        $region65: #{tpu_custom_call.1} parent=47 // pred_check
          %p1320 = pneg %p228
        $region66: #{tpu_custom_call.1} parent=47 // pred_check_branch
          %1322 = sbr.rel (%p1320) target = $region68
        $region67: #{tpu_custom_call.1} parent=47 // pred_region
          %s1324 = ssub.s32 128, 128
          %1325 = vsyncadd %s1306, %s1324
          %s1326 = smul.addr %s36, 2
          %s1327 = sadd.s32 %s37, %s1326
          %s1328 = smul.addr %s1327, 64
          %s1329 = scalar_lea.hbm %s7, %s1328
          %s1330 = sshll.u32 %s1309, 4
          %s1331 = int_to_ptr.vmem [resolvable:$true] %s1330
          %1336 = dma.vmem_to_hbm [thread:$0]  %s1331, 128, %s1329, %s1306, 64, 64, 4
        $region68: #{tpu_custom_call.1} parent=47 // pred_fallthru
          _
        // Predicated region
        $region69: #{tpu_custom_call.1} parent=47 // pred_check
          %p1337 = pneg %p256
        $region70: #{tpu_custom_call.1} parent=47 // pred_check_branch
          %1339 = sbr.rel (%p1337) target = $region72
        $region71: #{tpu_custom_call.1} parent=47 // pred_region
          %s1341 = ssub.s32 128, 128
          %1342 = vsyncadd %s1311, %s1341
          %s1343 = smul.addr %s36, 2
          %s1344 = sadd.s32 %s37, %s1343
          %s1345 = smul.addr %s1344, 64
          %s1346 = scalar_lea.hbm %s8, %s1345
          %s1347 = sshll.u32 %s1314, 4
          %s1348 = int_to_ptr.vmem [resolvable:$true] %s1347
          %1353 = dma.vmem_to_hbm [thread:$0]  %s1348, 128, %s1346, %s1311, 64, 64, 4
        $region72: #{tpu_custom_call.1} parent=47 // pred_fallthru
          _
        // Predicated region
        $region73: #{tpu_custom_call.1} parent=47 // pred_check
          %p1354 = pneg %p284
        $region74: #{tpu_custom_call.1} parent=47 // pred_check_branch
          %1356 = sbr.rel (%p1354) target = $region76
        $region75: #{tpu_custom_call.1} parent=47 // pred_region
          %s1358 = ssub.s32 128, 128
          %1359 = vsyncadd %s1316, %s1358
          %s1360 = smul.addr %s36, 2
          %s1361 = sadd.s32 %s37, %s1360
          %s1362 = smul.addr %s1361, 64
          %s1363 = scalar_lea.hbm %s9, %s1362
          %s1364 = sshll.u32 %s1319, 4
          %s1365 = int_to_ptr.vmem [resolvable:$true] %s1364
          %1370 = dma.vmem_to_hbm [thread:$0]  %s1365, 128, %s1363, %s1316, 64, 64, 4
        $region76: #{tpu_custom_call.1} parent=47 // pred_fallthru
          _
      $region48: #{tpu_custom_call.1} parent=5 // pred_fallthru
        _
      %p1371 = scmp.le.s32.totalorder 2, %s27
      // Predicated region
      $region77: #{tpu_custom_call.1} parent=5 // pred_check
        %p1372 = pneg %p1371
      $region78: #{tpu_custom_call.1} parent=5 // pred_check_branch
        %1374 = sbr.rel (%p1372) target = $region80
      $region79: #{tpu_custom_call.1} parent=5 // pred_region
        %s1375 = ssub.s32 %s27, 2
        // Predicated region
        $region81: #{tpu_custom_call.1} parent=79 // pred_check
          %p1376 = pneg %p234
        $region82: #{tpu_custom_call.1} parent=79 // pred_check_branch
          %1378 = sbr.rel (%p1376) target = $region84
        $region83: #{tpu_custom_call.1} parent=79 // pred_region
          %s1379 = sand.u32 %s219, 1
          %s1380 = scalar_lea.sflag [#allocation4], %s1379
          %s1381 = sand.u32 %s219, 1
          %s1382 = smul.addr %s1381, 8
          %s1383 = scalar_lea.vmem [#allocation10], %s1382
          %1384 = dma.done %s1380, 128
        $region84: #{tpu_custom_call.1} parent=79 // pred_fallthru
          _
        // Predicated region
        $region85: #{tpu_custom_call.1} parent=79 // pred_check
          %p1385 = pneg %p262
        $region86: #{tpu_custom_call.1} parent=79 // pred_check_branch
          %1387 = sbr.rel (%p1385) target = $region88
        $region87: #{tpu_custom_call.1} parent=79 // pred_region
          %s1388 = sand.u32 %s33, 1
          %s1389 = scalar_lea.sflag [#allocation12], %s1388
          %s1390 = sand.u32 %s247, 1
          %s1391 = smul.addr %s1390, 8
          %s1392 = scalar_lea.vmem [#allocation11], %s1391
          %1393 = dma.done %s1389, 128
        $region88: #{tpu_custom_call.1} parent=79 // pred_fallthru
          _
        // Predicated region
        $region89: #{tpu_custom_call.1} parent=79 // pred_check
          %p1394 = pneg %p290
        $region90: #{tpu_custom_call.1} parent=79 // pred_check_branch
          %1396 = sbr.rel (%p1394) target = $region92
        $region91: #{tpu_custom_call.1} parent=79 // pred_region
          %s1397 = sand.u32 %s33, 1
          %s1398 = scalar_lea.sflag [#allocation12], %s1397
          %s1399 = sand.u32 %s275, 1
          %s1400 = smul.addr %s1399, 8
          %s1401 = scalar_lea.vmem [#allocation13], %s1400
          %1402 = dma.done %s1398, 128
        $region92: #{tpu_custom_call.1} parent=79 // pred_fallthru
          _
      $region80: #{tpu_custom_call.1} parent=5 // pred_fallthru
        _
    $region6: #{tpu_custom_call.1} parent=1 // loop_footer
      %s31 = sadd.s32 1, %s27
    $region7: #{tpu_custom_call.1} parent=1 // loop_footer_branch
      %26 = sbr.rel target = $region3
    $region8: #{tpu_custom_call.1} parent=1 // loop_exit
      _
    %1403 = vsyncpa [#allocation3], 1
    %s1404 = scalar_lea.sflag [#allocation3], 1
    %1405 = vsyncpa %s1404, 1
    %1406 = vsyncpa [#allocation6], 1
    %1407 = vsyncpa [#allocation9], 1
    %1408 = vsyncpa [#allocation4], 1
    %s1409 = scalar_lea.sflag [#allocation4], 1
    %1410 = vsyncpa %s1409, 1
    %1411 = vsyncpa [#allocation12], 1
    %s1412 = scalar_lea.sflag [#allocation12], 1
    %1413 = vsyncpa %s1412, 1

</llo_original>
